<compile_context>
chip_gen: v7x
topology: tpu7x:2x2x1
jax: 0.10.0
libtpu: 0.0.40
codegen_flags: <defaults>
</compile_context>

<pallas_src>
import functools

import jax
import jax.numpy as jnp
from jax.experimental import pallas as pl
from jax.experimental.pallas import tpu as pltpu


# ----------------------------------------------------------------------------
# Plain-JAX glue (outside the kernel)
# ----------------------------------------------------------------------------
def _dft_matrix(n):
    """Ortho-normalized DFT matrix (real, imag) parts, shape (n, n), f32."""
    k = jnp.arange(n, dtype=jnp.float32)
    ang = -2.0 * jnp.pi * jnp.outer(k, k) / n
    scale = 1.0 / jnp.sqrt(jnp.float32(n))
    return (jnp.cos(ang) * scale).astype(jnp.float32), (jnp.sin(ang) * scale).astype(jnp.float32)


def _bilinear_align_corners(w, out_h, out_w):
    """F.interpolate(..., mode='bilinear', align_corners=True) on (F_dim, h, w, 2)."""
    f_dim, h, wd, _ = w.shape
    if h == out_h and wd == out_w:
        return w

    def coords(n_in, n_out):
        if n_out == 1:
            return jnp.zeros((1,), jnp.float32)
        return jnp.arange(n_out, dtype=jnp.float32) * (n_in - 1) / (n_out - 1)

    ys = coords(h, out_h)
    xs = coords(wd, out_w)
    y0 = jnp.floor(ys).astype(jnp.int32)
    y1 = jnp.minimum(y0 + 1, h - 1)
    wy = (ys - y0.astype(jnp.float32))[None, :, None, None]
    x0 = jnp.floor(xs).astype(jnp.int32)
    x1 = jnp.minimum(x0 + 1, wd - 1)
    wx = (xs - x0.astype(jnp.float32))[None, None, :, None]

    w_y = w[:, y0, :, :] * (1.0 - wy) + w[:, y1, :, :] * wy
    out = w_y[:, :, x0, :] * (1.0 - wx) + w_y[:, :, x1, :] * wx
    return out


# ----------------------------------------------------------------------------
# VMEM budgeting (padded, per-generation) and channel-block choice
# ----------------------------------------------------------------------------
def _round_up(x, m):
    return (x + m - 1) // m * m


def _vmem_budget_bytes():
    """(budget_for_ct_choice, scoped_vmem_limit) from the TPU generation.

    ~60% of physical VMEM for the sizing estimate and ~75% as the compiler's
    scoped limit: ~38/48 MiB on v7x (64 MiB per TC), ~77/96 MiB on v5e/v6e
    (128 MiB). Falls back to v7x-sized numbers if the query is unavailable.
    """
    try:
        cap = int(pltpu.get_tpu_info().vmem_capacity_bytes)
    except Exception:
        cap = 64 * 1024 * 1024
    budget = min(int(cap * 0.60), 96 * 1024 * 1024)
    limit = min(int(cap * 0.75), 112 * 1024 * 1024)
    return budget, limit


def _choose_ct(channel, batch, h, w, budget_bytes):
    """Largest channel block that divides `channel`, keeps at least two grid
    steps (both v7x TensorCores busy), and whose (8,128)-padded VMEM footprint
    fits the per-generation budget."""
    f32 = 4
    plane_hw = _round_up(h, 8) * _round_up(w, 128)      # natural (H, W) layout
    plane_wh = _round_up(w, 8) * _round_up(h, 128)      # transposed (W, H) layout
    plane = max(plane_hw, plane_wh)
    dft = f32 * (_round_up(h, 8) * _round_up(2 * h, 128)
                 + _round_up(w, 8) * _round_up(2 * w, 128))   # single-buffered constants

    def est(ct):
        x_blk = 2 * f32 * ct * plane_hw                             # input, double buffered
        w_blk = f32 * 2 * ct * plane_wh                             # filter, Buffered(1)
        out_pad = max(2 * _round_up(ct, 8) * _round_up(h * w, 128),  # lane-dense layout
                      2 * ct * plane_hw)                             # (H, W) layout
        out_blk = 2 * f32 * out_pad                                 # output, double buffered
        scratch = 12 * f32 * ct * plane                             # live in-kernel intermediates
        return x_blk + w_blk + out_blk + dft + scratch

    min_steps = min(2, batch * channel)
    best = 1
    for ct in range(1, channel + 1):
        if channel % ct:
            continue
        if batch * (channel // ct) < min_steps:
            continue
        if est(ct) <= budget_bytes:
            best = ct
    return best


# ----------------------------------------------------------------------------
# Kernel
# ----------------------------------------------------------------------------
def _fourier_filter_kernel(x_ref, w_ref, fa_ref, *rest, lane_dense, square, operand_dtype):
    if square:
        (out_ref,) = rest
        fb_ref = fa_ref
    else:
        fb_ref, out_ref = rest

    ct, H, W = x_ref.shape
    dot = functools.partial(jnp.dot, preferred_element_type=jnp.float32)

    fa = fa_ref[...].astype(operand_dtype)          # (H, 2H) = [Far | Fai]
    fb = fb_ref[...].astype(operand_dtype)          # (W, 2W) = [Fbr | Fbi]

    # ---- forward DFT along W (x is real): one dot, M = ct*H -----------------
    x2 = x_ref[...].reshape(ct * H, W).astype(operand_dtype)
    a = dot(x2, fb)                                  # (ct*H, 2W) = [A_re | A_im]

    # one batched per-channel transpose of the full [A_re | A_im] block
    at = a.reshape(ct, H, 2 * W).swapaxes(1, 2)      # (ct, 2W, H): [A_re^T ; A_im^T]

    # ---- forward DFT along H (complex): ONE dot, re/im stacked along M ------
    d = dot(at.reshape(ct * 2 * W, H).astype(operand_dtype), fa)
    d = d.reshape(ct, 2, W, 2 * H)
    dr, di = d[:, 0], d[:, 1]                        # (ct, W, 2H)
    x_re = dr[..., :H] - di[..., H:]                 # Re(F_H x F_W)^T   (ct, W, H)
    x_im = dr[..., H:] + di[..., :H]                 # Im(F_H x F_W)^T

    # ---- complex filter multiply (weights pre-transposed to (2, C, W, H)) ---
    wgt = w_ref[...]                                 # (2, ct, W, H), f32
    w_re, w_im = wgt[0], wgt[1]
    y_re = x_re * w_re - x_im * w_im
    y_im = x_re * w_im + x_im * w_re

    # ---- inverse DFT along H (× conj(F_H)): ONE dot, re/im stacked along M --
    y_st = jnp.stack([y_re, y_im], axis=1)           # (ct, 2, W, H)
    e = dot(y_st.reshape(ct * 2 * W, H).astype(operand_dtype), fa)
    e = e.reshape(ct, 2, W, 2 * H)
    er, ei = e[:, 0], e[:, 1]
    u_re_t = er[..., :H] + ei[..., H:]               # (ct, W, H)
    u_im_t = ei[..., :H] - er[..., H:]

    # back to the natural (H, W) layout: one batched transpose for re & im
    u_st = jnp.stack([u_re_t, u_im_t], axis=1).swapaxes(2, 3)   # (ct, 2, H, W)

    # ---- inverse DFT along W (× conj(F_W)): ONE dot, re/im stacked along M --
    g = dot(u_st.reshape(ct * 2 * H, W).astype(operand_dtype), fb)
    g = g.reshape(ct, 2, H, 2 * W)
    gr, gi = g[:, 0], g[:, 1]
    z_re = gr[..., :W] + gi[..., W:]                 # (ct, H, W)
    z_im = gi[..., :W] - gr[..., W:]

    if lane_dense:
        out_ref[0] = z_re.reshape(ct, H * W)         # real -> channels 0..C-1
        out_ref[1] = z_im.reshape(ct, H * W)         # imag -> channels C..2C-1
    else:
        out_ref[0] = z_re
        out_ref[1] = z_im


# ----------------------------------------------------------------------------
# Wrapper
# ----------------------------------------------------------------------------
def fourier_filter_forward(x, complex_weight, ct=None, use_bf16_operands=False):
    """Pallas implementation of Fourier_filter.forward.

    x: (batch, channel, H, W) f32
    complex_weight: (F_dim, filter_h, filter_w, 2) f32 with F_dim == channel
    returns: (batch, 2*channel, H, W) f32  (== torch.cat([real, imag], dim=1))
    """
    batch, channel, a, b = x.shape
    weight = _bilinear_align_corners(complex_weight, a, b)          # (C, a, b, 2)
    # Filter in the kernel's middle layout (W, H), re/im stacked in one operand.
    w_stacked = jnp.stack([jnp.transpose(weight[..., 0], (0, 2, 1)),
                           jnp.transpose(weight[..., 1], (0, 2, 1))], axis=0)   # (2, C, b, a)

    far, fai = _dft_matrix(a)
    fa_c = jnp.concatenate([far, fai], axis=1)                      # (a, 2a) = [Far | Fai]
    square = (a == b)
    if not square:
        fbr, fbi = _dft_matrix(b)
        fb_c = jnp.concatenate([fbr, fbi], axis=1)                  # (b, 2b) = [Fbr | Fbi]

    operand_dtype = jnp.bfloat16 if use_bf16_operands else jnp.float32
    if use_bf16_operands:                       # v6e/v7x only; ~1e-2 rel error expected
        x = x.astype(jnp.bfloat16)
        fa_c = fa_c.astype(jnp.bfloat16)
        if not square:
            fb_c = fb_c.astype(jnp.bfloat16)

    budget, vmem_limit = _vmem_budget_bytes()
    if ct is None:
        ct = _choose_ct(channel, batch, a, b, budget)
    assert channel % ct == 0
    # Lane-dense output only when it is both useful (W < 128) and tile-legal.
    lane_dense = (b < 128) and (ct % 8 == 0 or ct == channel)

    # channel-blocks outer, batch inner -> filter blocks not re-DMA'd across batch
    grid = (channel // ct, batch)

    const_mode = pl.Buffered(1)   # single-buffer constants: pure VMEM saving
    x_spec = pl.BlockSpec((None, ct, a, b), lambda cb, bi: (bi, cb, 0, 0))
    w_spec = pl.BlockSpec((2, ct, b, a), lambda cb, bi: (0, cb, 0, 0),
                          pipeline_mode=const_mode)
    fa_spec = pl.BlockSpec((a, 2 * a), lambda cb, bi: (0, 0), pipeline_mode=const_mode)

    if lane_dense:
        out_shape = jax.ShapeDtypeStruct((batch, 2, channel, a * b), jnp.float32)
        out_spec = pl.BlockSpec((None, 2, ct, a * b), lambda cb, bi: (bi, 0, cb, 0))
    else:
        out_shape = jax.ShapeDtypeStruct((batch, 2, channel, a, b), jnp.float32)
        out_spec = pl.BlockSpec((None, 2, ct, a, b), lambda cb, bi: (bi, 0, cb, 0, 0))

    inputs = [x, w_stacked, fa_c]
    in_specs = [x_spec, w_spec, fa_spec]
    if not square:
        fb_spec = pl.BlockSpec((b, 2 * b), lambda cb, bi: (0, 0), pipeline_mode=const_mode)
        inputs.append(fb_c)
        in_specs.append(fb_spec)

    kernel = functools.partial(_fourier_filter_kernel,
                               lane_dense=lane_dense, square=square,
                               operand_dtype=operand_dtype)

    flops = 8 * batch * channel * a * b * (a + b)      # 4 dots per (b, channel) plane
    bytes_accessed = 4 * (batch * channel * a * b      # x
                          + 2 * channel * a * b        # filter
                          + 2 * batch * channel * a * b)   # output

    out = pl.pallas_call(
        kernel,
        out_shape=out_shape,
        grid_spec=pltpu.PrefetchScalarGridSpec(
            num_scalar_prefetch=0,
            grid=grid,
            in_specs=in_specs,
            out_specs=out_spec,
        ),
        compiler_params=pltpu.CompilerParams(
            dimension_semantics=("parallel", "parallel"),
            vmem_limit_bytes=vmem_limit),
        cost_estimate=pl.CostEstimate(flops=flops, transcendentals=0,
                                      bytes_accessed=bytes_accessed),
    )(*inputs)

    # (B, 2, C, ...) -> (B, 2C, H, W): contiguous view; channels 0..C-1 = real,
    # C..2C-1 = imag  ==  torch.cat([x.real, x.imag], dim=1).
    return out.reshape(batch, 2 * channel, a, b)


# ----------------------------------------------------------------------------
# Reference + test
# ----------------------------------------------------------------------------
def _reference(x, complex_weight):
    """Pure-JAX reference (mirrors the PyTorch forward)."""
    a, b = x.shape[2], x.shape[3]
    w = _bilinear_align_corners(complex_weight, a, b)
    w_c = w[..., 0] + 1j * w[..., 1]
    xf = jnp.fft.fft2(x, axes=(2, 3), norm="ortho")
    xf = xf * w_c[None, ...]
    xi = jnp.fft.ifft2(xf, axes=(2, 3), norm="ortho")
    return jnp.concatenate([jnp.real(xi), jnp.imag(xi)], axis=1).astype(jnp.float32)


if __name__ == "__main__":
    # Small shapes: batch=2, channel=F_dim=4, spatial 16x16, filter_h=filter_w=16.
    batch, channel, H, W = 2, 4, 16, 16
    F_dim, filter_h, filter_w = channel, H, W

    key = jax.random.PRNGKey(0)
    kx, kw = jax.random.split(key)
    x = jax.random.normal(kx, (batch, channel, H, W), dtype=jnp.float32)
    scale = 1.0 / F_dim
    complex_weight = (jax.random.normal(kw, (F_dim, filter_h, filter_w, 2),
                                        dtype=jnp.float32) * scale)

    y = jax.block_until_ready(fourier_filter_forward(x, complex_weight))

    y_ref = _reference(x, complex_weight)
    assert y.shape == (batch, 2 * channel, H, W)
    assert jnp.allclose(y, y_ref, atol=1e-3, rtol=1e-3)

    print("KERNEL_OK")
</pallas_src>

<mosaic_0001>
module attributes {stable_mosaic.version = 11 : i64} {
  func.func @_fourier_filter_kernel(%arg0: i32, %arg1: i32, %arg2: memref<1x4x16x16xf32, #tpu.memory_space<vmem>>, %arg3: memref<2x4x16x16xf32, #tpu.memory_space<vmem>>, %arg4: memref<16x32xf32, #tpu.memory_space<vmem>>, %arg5: memref<1x2x4x256xf32, #tpu.memory_space<vmem>>) attributes {dimension_semantics = [#tpu.dimension_semantics<parallel>, #tpu.dimension_semantics<parallel>], iteration_bounds = array<i64: 1, 2>, scalar_prefetch = 0 : i64, scratch_operands = 0 : i64, tpu.core_type = #tpu.core_type<tc>, window_params = [{transform_indices = @transform_0, window_bounds = array<i64: 1, 4, 16, 16>}, {pipeline_mode = #tpu.pipeline_mode<synchronous>, transform_indices = @transform_1, window_bounds = array<i64: 2, 4, 16, 16>}, {pipeline_mode = #tpu.pipeline_mode<synchronous>, transform_indices = @transform_2, window_bounds = array<i64: 16, 32>}, {transform_indices = @transform_3, window_bounds = array<i64: 1, 2, 4, 256>}]} {
    %c0 = arith.constant 0 : index
    %c0_0 = arith.constant 0 : index
    %0 = vector.load %arg4[%c0, %c0_0] : memref<16x32xf32, #tpu.memory_space<vmem>>, vector<16x32xf32>
    %c0_1 = arith.constant 0 : index
    %c0_2 = arith.constant 0 : index
    %1 = vector.load %arg4[%c0_1, %c0_2] : memref<16x32xf32, #tpu.memory_space<vmem>>, vector<16x32xf32>
    %c0_3 = arith.constant 0 : index
    %c0_4 = arith.constant 0 : index
    %c0_5 = arith.constant 0 : index
    %c0_6 = arith.constant 0 : index
    %2 = vector.load %arg2[%c0_3, %c0_4, %c0_5, %c0_6] : memref<1x4x16x16xf32, #tpu.memory_space<vmem>>, vector<1x4x16x16xf32>
    %3 = vector.shape_cast %2 : vector<1x4x16x16xf32> to vector<4x16x16xf32>
    %4 = vector.shape_cast %3 : vector<4x16x16xf32> to vector<64x16xf32>
    %cst = arith.constant dense<0.000000e+00> : vector<64x32xf32>
    %5 = tpu.matmul %4, %1, %cst {dimension_numbers = #tpu.dot_dimension_numbers<[1], [0], [0], [1], [0, 0, 1, 1], [], []>} : vector<64x16xf32>, vector<16x32xf32>, vector<64x32xf32> -> vector<64x32xf32>
    %6 = vector.shape_cast %5 : vector<64x32xf32> to vector<4x16x32xf32>
    %7 = tpu.transpose %6, [0, 2, 1] : vector<4x16x32xf32> -> vector<4x32x16xf32>
    %8 = vector.shape_cast %7 : vector<4x32x16xf32> to vector<128x16xf32>
    %cst_7 = arith.constant dense<0.000000e+00> : vector<128x32xf32>
    %9 = tpu.matmul %8, %0, %cst_7 {dimension_numbers = #tpu.dot_dimension_numbers<[1], [0], [0], [1], [0, 0, 1, 1], [], []>} : vector<128x16xf32>, vector<16x32xf32>, vector<128x32xf32> -> vector<128x32xf32>
    %10 = vector.shape_cast %9 : vector<128x32xf32> to vector<4x2x16x32xf32>
    %11 = vector.extract_strided_slice %10 {offsets = [0, 0, 0, 0], sizes = [4, 1, 16, 32], strides = [1, 1, 1, 1]} : vector<4x2x16x32xf32> to vector<4x1x16x32xf32>
    %12 = vector.shape_cast %11 : vector<4x1x16x32xf32> to vector<4x16x32xf32>
    %13 = vector.extract_strided_slice %10 {offsets = [0, 1, 0, 0], sizes = [4, 1, 16, 32], strides = [1, 1, 1, 1]} : vector<4x2x16x32xf32> to vector<4x1x16x32xf32>
    %14 = vector.shape_cast %13 : vector<4x1x16x32xf32> to vector<4x16x32xf32>
    %15 = vector.extract_strided_slice %12 {offsets = [0, 0, 0], sizes = [4, 16, 16], strides = [1, 1, 1]} : vector<4x16x32xf32> to vector<4x16x16xf32>
    %16 = vector.extract_strided_slice %14 {offsets = [0, 0, 16], sizes = [4, 16, 16], strides = [1, 1, 1]} : vector<4x16x32xf32> to vector<4x16x16xf32>
    %17 = arith.subf %15, %16 : vector<4x16x16xf32>
    %18 = vector.extract_strided_slice %12 {offsets = [0, 0, 16], sizes = [4, 16, 16], strides = [1, 1, 1]} : vector<4x16x32xf32> to vector<4x16x16xf32>
    %19 = vector.extract_strided_slice %14 {offsets = [0, 0, 0], sizes = [4, 16, 16], strides = [1, 1, 1]} : vector<4x16x32xf32> to vector<4x16x16xf32>
    %20 = arith.addf %18, %19 : vector<4x16x16xf32>
    %c0_8 = arith.constant 0 : index
    %c0_9 = arith.constant 0 : index
    %c0_10 = arith.constant 0 : index
    %c0_11 = arith.constant 0 : index
    %21 = vector.load %arg3[%c0_8, %c0_9, %c0_10, %c0_11] : memref<2x4x16x16xf32, #tpu.memory_space<vmem>>, vector<2x4x16x16xf32>
    %22 = vector.extract_strided_slice %21 {offsets = [0, 0, 0, 0], sizes = [1, 4, 16, 16], strides = [1, 1, 1, 1]} : vector<2x4x16x16xf32> to vector<1x4x16x16xf32>
    %23 = vector.shape_cast %22 : vector<1x4x16x16xf32> to vector<4x16x16xf32>
    %24 = vector.extract_strided_slice %21 {offsets = [1, 0, 0, 0], sizes = [1, 4, 16, 16], strides = [1, 1, 1, 1]} : vector<2x4x16x16xf32> to vector<1x4x16x16xf32>
    %25 = vector.shape_cast %24 : vector<1x4x16x16xf32> to vector<4x16x16xf32>
    %26 = arith.mulf %17, %23 : vector<4x16x16xf32>
    %27 = arith.mulf %20, %25 : vector<4x16x16xf32>
    %28 = arith.subf %26, %27 : vector<4x16x16xf32>
    %29 = arith.mulf %17, %25 : vector<4x16x16xf32>
    %30 = arith.mulf %20, %23 : vector<4x16x16xf32>
    %31 = arith.addf %29, %30 : vector<4x16x16xf32>
    %32 = vector.shape_cast %28 : vector<4x16x16xf32> to vector<4x1x16x16xf32>
    %33 = vector.shape_cast %31 : vector<4x16x16xf32> to vector<4x1x16x16xf32>
    %34 = tpu.concatenate %32, %33 in 1 : vector<4x1x16x16xf32>, vector<4x1x16x16xf32> -> vector<4x2x16x16xf32>
    %35 = vector.shape_cast %34 : vector<4x2x16x16xf32> to vector<128x16xf32>
    %cst_12 = arith.constant dense<0.000000e+00> : vector<128x32xf32>
    %36 = tpu.matmul %35, %0, %cst_12 {dimension_numbers = #tpu.dot_dimension_numbers<[1], [0], [0], [1], [0, 0, 1, 1], [], []>} : vector<128x16xf32>, vector<16x32xf32>, vector<128x32xf32> -> vector<128x32xf32>
    %37 = vector.shape_cast %36 : vector<128x32xf32> to vector<4x2x16x32xf32>
    %38 = vector.extract_strided_slice %37 {offsets = [0, 0, 0, 0], sizes = [4, 1, 16, 32], strides = [1, 1, 1, 1]} : vector<4x2x16x32xf32> to vector<4x1x16x32xf32>
    %39 = vector.shape_cast %38 : vector<4x1x16x32xf32> to vector<4x16x32xf32>
    %40 = vector.extract_strided_slice %37 {offsets = [0, 1, 0, 0], sizes = [4, 1, 16, 32], strides = [1, 1, 1, 1]} : vector<4x2x16x32xf32> to vector<4x1x16x32xf32>
    %41 = vector.shape_cast %40 : vector<4x1x16x32xf32> to vector<4x16x32xf32>
    %42 = vector.extract_strided_slice %39 {offsets = [0, 0, 0], sizes = [4, 16, 16], strides = [1, 1, 1]} : vector<4x16x32xf32> to vector<4x16x16xf32>
    %43 = vector.extract_strided_slice %41 {offsets = [0, 0, 16], sizes = [4, 16, 16], strides = [1, 1, 1]} : vector<4x16x32xf32> to vector<4x16x16xf32>
    %44 = arith.addf %42, %43 : vector<4x16x16xf32>
    %45 = vector.extract_strided_slice %41 {offsets = [0, 0, 0], sizes = [4, 16, 16], strides = [1, 1, 1]} : vector<4x16x32xf32> to vector<4x16x16xf32>
    %46 = vector.extract_strided_slice %39 {offsets = [0, 0, 16], sizes = [4, 16, 16], strides = [1, 1, 1]} : vector<4x16x32xf32> to vector<4x16x16xf32>
    %47 = arith.subf %45, %46 : vector<4x16x16xf32>
    %48 = vector.shape_cast %44 : vector<4x16x16xf32> to vector<4x1x16x16xf32>
    %49 = vector.shape_cast %47 : vector<4x16x16xf32> to vector<4x1x16x16xf32>
    %50 = tpu.concatenate %48, %49 in 1 : vector<4x1x16x16xf32>, vector<4x1x16x16xf32> -> vector<4x2x16x16xf32>
    %51 = tpu.transpose %50, [0, 1, 3, 2] : vector<4x2x16x16xf32> -> vector<4x2x16x16xf32>
    %52 = vector.shape_cast %51 : vector<4x2x16x16xf32> to vector<128x16xf32>
    %cst_13 = arith.constant dense<0.000000e+00> : vector<128x32xf32>
    %53 = tpu.matmul %52, %1, %cst_13 {dimension_numbers = #tpu.dot_dimension_numbers<[1], [0], [0], [1], [0, 0, 1, 1], [], []>} : vector<128x16xf32>, vector<16x32xf32>, vector<128x32xf32> -> vector<128x32xf32>
    %54 = vector.shape_cast %53 : vector<128x32xf32> to vector<4x2x16x32xf32>
    %55 = vector.extract_strided_slice %54 {offsets = [0, 0, 0, 0], sizes = [4, 1, 16, 32], strides = [1, 1, 1, 1]} : vector<4x2x16x32xf32> to vector<4x1x16x32xf32>
    %56 = vector.shape_cast %55 : vector<4x1x16x32xf32> to vector<4x16x32xf32>
    %57 = vector.extract_strided_slice %54 {offsets = [0, 1, 0, 0], sizes = [4, 1, 16, 32], strides = [1, 1, 1, 1]} : vector<4x2x16x32xf32> to vector<4x1x16x32xf32>
    %58 = vector.shape_cast %57 : vector<4x1x16x32xf32> to vector<4x16x32xf32>
    %59 = vector.extract_strided_slice %56 {offsets = [0, 0, 0], sizes = [4, 16, 16], strides = [1, 1, 1]} : vector<4x16x32xf32> to vector<4x16x16xf32>
    %60 = vector.extract_strided_slice %58 {offsets = [0, 0, 16], sizes = [4, 16, 16], strides = [1, 1, 1]} : vector<4x16x32xf32> to vector<4x16x16xf32>
    %61 = arith.addf %59, %60 : vector<4x16x16xf32>
    %62 = vector.extract_strided_slice %58 {offsets = [0, 0, 0], sizes = [4, 16, 16], strides = [1, 1, 1]} : vector<4x16x32xf32> to vector<4x16x16xf32>
    %63 = vector.extract_strided_slice %56 {offsets = [0, 0, 16], sizes = [4, 16, 16], strides = [1, 1, 1]} : vector<4x16x32xf32> to vector<4x16x16xf32>
    %64 = arith.subf %62, %63 : vector<4x16x16xf32>
    %65 = vector.shape_cast %61 : vector<4x16x16xf32> to vector<4x256xf32>
    %c0_14 = arith.constant 0 : index
    %c0_15 = arith.constant 0 : index
    %c0_16 = arith.constant 0 : index
    %c0_17 = arith.constant 0 : index
    %66 = vector.load %arg5[%c0_14, %c0_15, %c0_16, %c0_17] : memref<1x2x4x256xf32, #tpu.memory_space<vmem>>, vector<1x1x4x256xf32>
    %67 = vector.shape_cast %66 : vector<1x1x4x256xf32> to vector<4x256xf32>
    %68 = vector.shape_cast %65 : vector<4x256xf32> to vector<1x1x4x256xf32>
    tpu.vector_store %arg5[%c0_14, %c0_15, %c0_16, %c0_17], %68 {strides = array<i32>} : memref<1x2x4x256xf32, #tpu.memory_space<vmem>>, vector<1x1x4x256xf32>,
    %69 = vector.shape_cast %64 : vector<4x16x16xf32> to vector<4x256xf32>
    %c0_18 = arith.constant 0 : index
    %c1 = arith.constant 1 : index
    %c0_19 = arith.constant 0 : index
    %c0_20 = arith.constant 0 : index
    %70 = vector.load %arg5[%c0_18, %c1, %c0_19, %c0_20] : memref<1x2x4x256xf32, #tpu.memory_space<vmem>>, vector<1x1x4x256xf32>
    %71 = vector.shape_cast %70 : vector<1x1x4x256xf32> to vector<4x256xf32>
    %72 = vector.shape_cast %69 : vector<4x256xf32> to vector<1x1x4x256xf32>
    tpu.vector_store %arg5[%c0_18, %c1, %c0_19, %c0_20], %72 {strides = array<i32>} : memref<1x2x4x256xf32, #tpu.memory_space<vmem>>, vector<1x1x4x256xf32>,
    return
  }
  func.func @transform_0(%arg0: i32, %arg1: i32) -> (i32, i32, i32, i32) {
    %c0_i32 = arith.constant 0 : i32
    %c0_i32_0 = arith.constant 0 : i32
    %c0_i32_1 = arith.constant 0 : i32
    return %arg1, %arg0, %c0_i32, %c0_i32_0 : i32, i32, i32, i32
  }
  func.func @transform_1(%arg0: i32, %arg1: i32) -> (i32, i32, i32, i32) {
    %c0_i32 = arith.constant 0 : i32
    %c0_i32_0 = arith.constant 0 : i32
    %c0_i32_1 = arith.constant 0 : i32
    %c0_i32_2 = arith.constant 0 : i32
    return %c0_i32, %arg0, %c0_i32_0, %c0_i32_1 : i32, i32, i32, i32
  }
  func.func @transform_2(%arg0: i32, %arg1: i32) -> (i32, i32) {
    %c0_i32 = arith.constant 0 : i32
    %c0_i32_0 = arith.constant 0 : i32
    %c0_i32_1 = arith.constant 0 : i32
    return %c0_i32, %c0_i32_0 : i32, i32
  }
  func.func @transform_3(%arg0: i32, %arg1: i32) -> (i32, i32, i32, i32) {
    %c0_i32 = arith.constant 0 : i32
    %c0_i32_0 = arith.constant 0 : i32
    %c0_i32_1 = arith.constant 0 : i32
    return %arg1, %c0_i32, %arg0, %c0_i32_0 : i32, i32, i32, i32
  }
}

</mosaic_0001>

<llo_original>
// kernel: tpu_custom_call.1
$region0: #{tpu_custom_call.1}
  #allocation0 [shape = 'u32[]', space=smem, size = 0x4, offset = 0x4, fixed_abs, tag = 'smem constant byte address 0x4 - core index']
  #allocation1 [shape = 'u32[144,128]{1,0:T(1,128)}', space=vmem, size = 0x12000, scoped, tag = 'internal scratch']
  %s0 = inlined_call_operand.hbm [shape: f32[2,4,16,16], index: 0, kind: input, shape index: {}]
  %s1 = inlined_call_operand.hbm [shape: f32[2,4,16,16], index: 1, kind: input, shape index: {}]
  %s2 = inlined_call_operand.hbm [shape: f32[16,32], index: 2, kind: input, shape index: {}]
  %s3 = inlined_call_operand.hbm [shape: f32[2,2,4,256], index: 3, kind: output, shape index: {}]
  %s4 = sld [smem:[#allocation0]]
  $region57: #{tpu_custom_call.1} parent=0
    _
  %s6 = ssub.s32 1, %s4
  %s7 = scalar_select 0, %s6, %s4
  $region1: #{tpu_custom_call.1} parent=0
    #allocation2 [shape = 'u8[65536]{0}', space=vmem, size = 0x10000, scoped, tag = 'input window, operand 0']
    #allocation3 [shape = 's32[2]{0}', space=sflag, size = 0x8, scoped, tag = 'scoped memory for tpu_custom_call.1']
    #allocation4 [shape = 's32[2]{0}', space=sflag, size = 0x8, scoped, tag = 'scoped memory for tpu_custom_call.1']
    #allocation5 [shape = 'u8[65536]{0}', space=vmem, size = 0x10000, scoped, tag = 'input window, operand 1, single buffered']
    #allocation6 [shape = 's32[1]{0}', space=sflag, size = 0x4, scoped, tag = 'scoped memory for tpu_custom_call.1']
    #allocation7 [shape = 'u8[8192]{0}', space=vmem, size = 0x2000, scoped, tag = 'input window, operand 2, single buffered']
    #allocation8 [shape = 'u8[16384]{0}', space=vmem, size = 0x4000, scoped, tag = 'output window, operand 0']
    %8 = vsyncpa [#allocation3], 0
    %s9 = scalar_lea.sflag [#allocation3], 1
    %10 = vsyncpa %s9, 0
    %11 = vsyncpa [#allocation6], 0
    %12 = vsyncpa [#allocation4], 0
    %s13 = scalar_lea.sflag [#allocation4], 1
    %14 = vsyncpa %s13, 0
    loop: start=0, step=1, limit=4
    $region2: #{tpu_custom_call.1} parent=1 // loop_pre_header
      _
    $region3: #{tpu_custom_call.1} parent=1 // loop_header
      %s16 = sphi 0, %s20
      %p17 = scmp.ge.s32.totalorder %s16, 4
      %s23 = sphi 0, %s35
      %s24 = sphi 0, %s31
      %s25 = sphi 0, %s23
      %s26 = sphi 0, %s24
      %s27 = sphi 0, %s25
      %s28 = sphi 0, %s26
      %s40 = sphi 0, %s42
      %s43 = sphi 0, %s40
      %s44 = sphi 0, %s43
      %s60 = sphi 0, %s44
      %s66 = sphi 0, %s68
      %s69 = sphi 0, %s66
      %s70 = sphi 0, %s69
      %s86 = sphi 0, %s70
      %s90 = sphi 0, %s90
      %s92 = sphi 0, %s90
      %s93 = sphi 0, %s92
      %s107 = sphi 0, %s93
      %s115 = sphi 0, %s117
      %s118 = sphi 0, %s115
      %s119 = sphi 0, %s118
      %s135 = sphi 0, %s119
    $region4: #{tpu_custom_call.1} parent=1 // loop_header_branch
      %19 = sbr.rel (%p17) target = $region8
    $region5: #{tpu_custom_call.1} parent=1 // loop_body
      %s21 = ssub.s32 %s16, 1
      %s22 = ssub.s32 %s16, 2
      %s29 = sadd.s32 1, %s24
      %p30 = scmp.ge.s32.totalorder %s29, 2
      %s31 = scalar_select %p30, 0, %s29
      %s32 = sadd.s32 1, %s23
      %s33 = scalar_select %p30, %s32, %s23
      %p34 = scmp.ge.s32.totalorder %s33, 1
      %s35 = scalar_select %p34, 0, %s33
      %s36 = ssub.s32 %s24, %s31
      %s37 = ssub.s32 %s23, %s35
      %s38 = sor.u32 %s36, %s37
      %p39 = scmp.eq.s32.totalorder %s38, 0
      %s41 = sadd.s32 %s40, 1
      %s42 = scalar_select %p39, %s40, %s41
      %p45 = pneg %p39
      %p46 = scmp.eq.s32.totalorder %s16, 1
      %p47 = por %p45, %p46
      %p48 = scmp.ne.s32.totalorder %s40, %s43
      %p49 = scmp.eq.s32.totalorder %s16, 0
      %p50 = por %p48, %p49
      %p51 = scmp.ne.s32.totalorder %s40, %s43
      %p52 = scmp.eq.s32.totalorder %s21, 1
      %p53 = por %p51, %p52
      %p54 = scmp.ne.s32.totalorder %s43, %s44
      %p55 = scmp.eq.s32.totalorder %s21, 0
      %p56 = por %p54, %p55
      %p57 = scmp.ne.s32.totalorder %s43, %s44
      %p58 = scmp.eq.s32.totalorder %s22, 1
      %p59 = por %p57, %p58
      %p61 = scmp.ne.s32.totalorder %s44, %s60
      %p62 = scmp.eq.s32.totalorder %s22, 0
      %p63 = por %p61, %p62
      %s64 = ssub.s32 %s23, %s35
      %p65 = scmp.eq.s32.totalorder %s64, 0
      %s67 = sadd.s32 %s66, 1
      %s68 = scalar_select %p65, %s66, %s67
      %p71 = pneg %p65
      %p72 = scmp.eq.s32.totalorder %s16, 1
      %p73 = por %p71, %p72
      %p74 = scmp.ne.s32.totalorder %s66, %s69
      %p75 = scmp.eq.s32.totalorder %s16, 0
      %p76 = por %p74, %p75
      %p77 = scmp.ne.s32.totalorder %s66, %s69
      %p78 = scmp.eq.s32.totalorder %s21, 1
      %p79 = por %p77, %p78
      %p80 = scmp.ne.s32.totalorder %s69, %s70
      %p81 = scmp.eq.s32.totalorder %s21, 0
      %p82 = por %p80, %p81
      %p83 = scmp.ne.s32.totalorder %s69, %s70
      %p84 = scmp.eq.s32.totalorder %s22, 1
      %p85 = por %p83, %p84
      %p87 = scmp.ne.s32.totalorder %s70, %s86
      %p88 = scmp.eq.s32.totalorder %s22, 0
      %p89 = por %p87, %p88
      %s91 = sadd.s32 %s90, 1
      %p94 = scmp.eq.s32.totalorder %s16, 1
      %p95 = scmp.ne.s32.totalorder %s90, %s92
      %p96 = scmp.eq.s32.totalorder %s16, 0
      %p97 = por %p95, %p96
      %p98 = scmp.ne.s32.totalorder %s90, %s92
      %p99 = scmp.eq.s32.totalorder %s21, 1
      %p100 = por %p98, %p99
      %p101 = scmp.ne.s32.totalorder %s92, %s93
      %p102 = scmp.eq.s32.totalorder %s21, 0
      %p103 = por %p101, %p102
      %p104 = scmp.ne.s32.totalorder %s92, %s93
      %p105 = scmp.eq.s32.totalorder %s22, 1
      %p106 = por %p104, %p105
      %p108 = scmp.ne.s32.totalorder %s93, %s107
      %p109 = scmp.eq.s32.totalorder %s22, 0
      %p110 = por %p108, %p109
      %s111 = ssub.s32 %s24, %s31
      %s112 = ssub.s32 %s23, %s35
      %s113 = sor.u32 %s111, %s112
      %p114 = scmp.eq.s32.totalorder %s113, 0
      %s116 = sadd.s32 %s115, 1
      %s117 = scalar_select %p114, %s115, %s116
      %p120 = pneg %p114
      %p121 = scmp.eq.s32.totalorder %s16, 1
      %p122 = por %p120, %p121
      %p123 = scmp.ne.s32.totalorder %s115, %s118
      %p124 = scmp.eq.s32.totalorder %s16, 0
      %p125 = por %p123, %p124
      %p126 = scmp.ne.s32.totalorder %s115, %s118
      %p127 = scmp.eq.s32.totalorder %s21, 1
      %p128 = por %p126, %p127
      %p129 = scmp.ne.s32.totalorder %s118, %s119
      %p130 = scmp.eq.s32.totalorder %s21, 0
      %p131 = por %p129, %p130
      %p132 = scmp.ne.s32.totalorder %s118, %s119
      %p133 = scmp.eq.s32.totalorder %s22, 1
      %p134 = por %p132, %p133
      %p136 = scmp.ne.s32.totalorder %s119, %s135
      %p137 = scmp.eq.s32.totalorder %s22, 0
      %p138 = por %p136, %p137
      %p139 = scmp.le.s32.totalorder 1, %s16
      %p140 = scmp.lt.s32.totalorder %s16, 3
      %p141 = pnand %p139, %p140
      %p142 = pneg %p141
      // Predicated region
      $region9: #{tpu_custom_call.1} parent=5 // pred_check
        _
      $region10: #{tpu_custom_call.1} parent=5 // pred_check_branch
        %144 = sbr.rel (%p141) target = $region12
      $region11: #{tpu_custom_call.1} parent=5 // pred_region
        %s145 = ssub.s32 %s16, 1
        // Predicated region
        $region13: #{tpu_custom_call.1} parent=11 // pred_check
          %p146 = pneg %p82
        $region14: #{tpu_custom_call.1} parent=11 // pred_check_branch
          %148 = sbr.rel (%p146) target = $region16
        $region15: #{tpu_custom_call.1} parent=11 // pred_region
          %s149 = smul.u32 4, %s25
          %s151 = ssub.s32 2048, 2048
          %152 = vsyncadd [#allocation6], %s151
          %s153 = smul.addr %s149, 2
          %s154 = smul.addr %s153, 128
          %s155 = scalar_lea.hbm %s1, %s154
          %s156 = sshll.u32 [#allocation5], 4
          %s157 = int_to_ptr.vmem [resolvable:$true] %s156
          %162 = dma.hbm_to_vmem [thread:$0]  %s155, 2048, %s157, [#allocation6], 128, 128, 8
        $region16: #{tpu_custom_call.1} parent=11 // pred_fallthru
          _
        // Predicated region
        $region17: #{tpu_custom_call.1} parent=11 // pred_check
          %p163 = pneg %p103
        $region18: #{tpu_custom_call.1} parent=11 // pred_check_branch
          %165 = sbr.rel (%p163) target = $region20
        $region19: #{tpu_custom_call.1} parent=11 // pred_region
          %s167 = ssub.s32 256, 256
          %168 = vsyncadd [#allocation6], %s167
          %s169 = sshll.u32 [#allocation7], 4
          %s170 = int_to_ptr.vmem [resolvable:$true] %s169
          %175 = dma.hbm_to_vmem [thread:$0]  %s2, 256, %s170, [#allocation6], 128, 128, 8
        $region20: #{tpu_custom_call.1} parent=11 // pred_fallthru
          _
      $region12: #{tpu_custom_call.1} parent=5 // pred_fallthru
        _
      %p176 = scmp.lt.s32.totalorder %s16, 2
      // Predicated region
      $region21: #{tpu_custom_call.1} parent=5 // pred_check
        %p177 = pneg %p176
      $region22: #{tpu_custom_call.1} parent=5 // pred_check_branch
        %179 = sbr.rel (%p177) target = $region24
      $region23: #{tpu_custom_call.1} parent=5 // pred_region
        // Predicated region
        $region25: #{tpu_custom_call.1} parent=23 // pred_check
          %p180 = pneg %p50
        $region26: #{tpu_custom_call.1} parent=23 // pred_check_branch
          %182 = sbr.rel (%p180) target = $region28
        $region27: #{tpu_custom_call.1} parent=23 // pred_region
          %s183 = sand.u32 %s40, 1
          %s184 = scalar_lea.sflag [#allocation3], %s183
          %s185 = sand.u32 %s40, 1
          %s186 = smul.addr %s185, 64
          %s187 = scalar_lea.vmem [#allocation2], %s186
          %s188 = smul.u32 4, %s23
          %s190 = ssub.s32 1024, 1024
          %191 = vsyncadd %s184, %s190
          %s192 = smul.addr %s188, 2
          %s193 = smul.addr %s24, 8
          %s194 = sadd.s32 %s192, %s193
          %s195 = smul.addr %s194, 128
          %s196 = scalar_lea.hbm %s0, %s195
          %s197 = sshll.u32 %s187, 4
          %s198 = int_to_ptr.vmem [resolvable:$true] %s197
          %203 = dma.hbm_to_vmem [thread:$0]  %s196, 1024, %s198, %s184, 128, 128, 8
        $region28: #{tpu_custom_call.1} parent=23 // pred_fallthru
          _
      $region24: #{tpu_custom_call.1} parent=5 // pred_fallthru
        _
      %p204 = scmp.le.s32.totalorder 1, %s16
      %p205 = scmp.lt.s32.totalorder %s16, 3
      %p206 = pnand %p204, %p205
      %p207 = pneg %p206
      // Predicated region
      $region29: #{tpu_custom_call.1} parent=5 // pred_check
        _
      $region30: #{tpu_custom_call.1} parent=5 // pred_check_branch
        %209 = sbr.rel (%p206) target = $region32
      $region31: #{tpu_custom_call.1} parent=5 // pred_region
        %s210 = ssub.s32 %s16, 1
        %s211 = sand.u32 %s43, 1
        %s212 = scalar_lea.sflag [#allocation3], %s211
        %s213 = sand.u32 %s43, 1
        %s214 = smul.addr %s213, 64
        %s215 = scalar_lea.vmem [#allocation2], %s214
        // Predicated region
        $region33: #{tpu_custom_call.1} parent=31 // pred_check
          %p216 = pneg %p56
        $region34: #{tpu_custom_call.1} parent=31 // pred_check_branch
          %218 = sbr.rel (%p216) target = $region36
        $region35: #{tpu_custom_call.1} parent=31 // pred_region
          %219 = dma.done %s212, 1024
        $region36: #{tpu_custom_call.1} parent=31 // pred_fallthru
          _
        // Predicated region
        $region37: #{tpu_custom_call.1} parent=31 // pred_check
          %p220 = pneg %p82
        $region38: #{tpu_custom_call.1} parent=31 // pred_check_branch
          %222 = sbr.rel (%p220) target = $region40
        $region39: #{tpu_custom_call.1} parent=31 // pred_region
          %223 = dma.done [#allocation6], 2048
        $region40: #{tpu_custom_call.1} parent=31 // pred_fallthru
          _
        // Predicated region
        $region41: #{tpu_custom_call.1} parent=31 // pred_check
          %p224 = pneg %p103
        $region42: #{tpu_custom_call.1} parent=31 // pred_check_branch
          %226 = sbr.rel (%p224) target = $region44
        $region43: #{tpu_custom_call.1} parent=31 // pred_region
          %227 = dma.done [#allocation6], 256
        $region44: #{tpu_custom_call.1} parent=31 // pred_fallthru
          _
        %s228 = sand.u32 %s43, 1
        %s229 = scalar_lea.sflag [#allocation3], %s228
        %s230 = sand.u32 %s43, 1
        %s231 = smul.addr %s230, 64
        %s232 = scalar_lea.vmem [#allocation2], %s231
        %p233 = pneg %p56
        %p234 = pneg %p53
        %p235 = pneg %p82
        %p236 = pneg %p79
        %p237 = pneg %p103
        %p238 = pneg %p100
        %p239 = pneg %p131
        %p240 = pneg %p128
        %s241 = sand.u32 %s118, 1
        %s242 = scalar_lea.sflag [#allocation4], %s241
        %s243 = sand.u32 %s118, 1
        %s244 = smul.addr %s243, 16
        %s245 = scalar_lea.vmem [#allocation8], %s244
        %s246 = smul.u32 4, %s25
        %s247 = smul.u32 4, %s25
        %v248 = vld [vmem:[#allocation7] sm:$0xff]
        %v249 = vld [vmem:[#allocation7 + $0x8] sm:$0xff]
        %v250 = vld [vmem:[%s215] sm:$0xff]
        %v251 = vld [vmem:[%s215 + $0x8] sm:$0xff]
        %v252 = vld [vmem:[%s215 + $0x10] sm:$0xff]
        %v253 = vld [vmem:[%s215 + $0x18] sm:$0xff]
        %v254 = vld [vmem:[%s215 + $0x20] sm:$0xff]
        %v255 = vld [vmem:[%s215 + $0x28] sm:$0xff]
        %v256 = vld [vmem:[%s215 + $0x30] sm:$0xff]
        %v257 = vld [vmem:[%s215 + $0x38] sm:$0xff]
        %vm258 = vcmask 130048
        %v260 = vsel %vm258, %v250, 0
        %v263 = vsel %vm258, %v251, 0
        %v266 = vsel %vm258, %v252, 0
        %v269 = vsel %vm258, %v253, 0
        %v272 = vsel %vm258, %v254, 0
        %v275 = vsel %vm258, %v255, 0
        %v278 = vsel %vm258, %v256, 0
        %v281 = vsel %vm258, %v257, 0
        %283 = vmatprep.subr.mxu0 0.0
        %284 = vmatpush1.msra.mxu0 %v248
        %285 = vmatprep.subr.mxu0 0.0
        %286 = vmatpush1.msra.mxu0 %v249
        %287 = vmatprep.subr.mxu0 0.0
        %288 = vmatpush1.msra.mxu0 0.0
        %289 = vmatprep.subr.mxu0 0.0
        %290 = vmatpush1.msra.mxu0 0.0
        %291 = vmatprep.subr.mxu0 0.0
        %292 = vmatpush1.msra.mxu0 0.0
        %293 = vmatprep.subr.mxu0 0.0
        %294 = vmatpush1.msra.mxu0 0.0
        %295 = vmatprep.subr.mxu0 0.0
        %296 = vmatpush1.msra.mxu0 0.0
        %297 = vmatprep.subr.mxu0 0.0
        %298 = vmatpush1.msra.mxu0 0.0
        %299 = vmatprep.subr.mxu0 0.0
        %300 = vmatpush1.msra.mxu0 0.0
        %301 = vmatprep.subr.mxu0 0.0
        %302 = vmatpush1.msra.mxu0 0.0
        %303 = vmatprep.subr.mxu0 0.0
        %304 = vmatpush1.msra.mxu0 0.0
        %305 = vmatprep.subr.mxu0 0.0
        %306 = vmatpush1.msra.mxu0 0.0
        %307 = vmatprep.subr.mxu0 0.0
        %308 = vmatpush1.msra.mxu0 0.0
        %309 = vmatprep.subr.mxu0 0.0
        %310 = vmatpush1.msra.mxu0 0.0
        %311 = vmatprep.subr.mxu0 0.0
        %312 = vmatpush1.msra.mxu0 0.0
        %313 = vmatprep.subr.mxu0 0.0
        %314 = vmatpush1.msra.mxu0 0.0
        %315 = vmatprep.subr.mxu0 0.0
        %316 = vmatpush1.msra.mxu0 0.0
        %317 = vmatprep.subr.mxu0 0.0
        %318 = vmatpush1.msra.mxu0 0.0
        %319 = vmatprep.subr.mxu0 0.0
        %320 = vmatpush1.msra.mxu0 0.0
        %321 = vmatprep.subr.mxu0 0.0
        %322 = vmatpush1.msra.mxu0 0.0
        %323 = vmatprep.subr.mxu0 0.0
        %324 = vmatpush1.msra.mxu0 0.0
        %325 = vmatprep.subr.mxu0 0.0
        %326 = vmatpush1.msra.mxu0 0.0
        %327 = vmatprep.subr.mxu0 0.0
        %328 = vmatpush1.msra.mxu0 0.0
        %329 = vmatprep.subr.mxu0 0.0
        %330 = vmatpush1.msra.mxu0 0.0
        %331 = vmatprep.subr.mxu0 0.0
        %332 = vmatpush1.msra.mxu0 0.0
        %333 = vmatprep.subr.mxu0 0.0
        %334 = vmatpush1.msra.mxu0 0.0
        %335 = vmatprep.subr.mxu0 0.0
        %336 = vmatpush1.msra.mxu0 0.0
        %337 = vmatprep.subr.mxu0 0.0
        %338 = vmatpush1.msra.mxu0 0.0
        %339 = vmatprep.subr.mxu0 0.0
        %340 = vmatpush1.msra.mxu0 0.0
        %341 = vmatprep.subr.mxu0 0.0
        %342 = vmatpush1.msra.mxu0 0.0
        %343 = vmatprep.subr.mxu0 0.0
        %344 = vmatpush1.msra.mxu0 0.0
        %345 = vmatprep.subr.mxu0 0.0
        %346 = vmatpush1.msra.mxu0 0.0
        %347 = vmatprep.mubr.f32.mxu0 0.0
        %348 = vmatmul.mubr.f32.gmra.mrb[0].mxu0 %v260
        %v349 = vpop.f32.mrb[0].mxu0
        %v350 = vadd.f32 0.0, %v349
        %v351 = vpop.f32.mrb[0].mxu0
        %352 = vmatprep.mubr.f32.mxu0 0.0
        %353 = vmatmul.mubr.f32.gmra.mrb[0].mxu0 %v263
        %v354 = vpop.f32.mrb[0].mxu0
        %v355 = vadd.f32 0.0, %v354
        %v356 = vpop.f32.mrb[0].mxu0
        %357 = vmatprep.mubr.f32.mxu0 0.0
        %358 = vmatmul.mubr.f32.gmra.mrb[0].mxu0 %v266
        %v359 = vpop.f32.mrb[0].mxu0
        %v360 = vadd.f32 0.0, %v359
        %v361 = vpop.f32.mrb[0].mxu0
        %362 = vmatprep.mubr.f32.mxu0 0.0
        %363 = vmatmul.mubr.f32.gmra.mrb[0].mxu0 %v269
        %v364 = vpop.f32.mrb[0].mxu0
        %v365 = vadd.f32 0.0, %v364
        %v366 = vpop.f32.mrb[0].mxu0
        %367 = vmatprep.mubr.f32.mxu0 0.0
        %368 = vmatmul.mubr.f32.gmra.mrb[0].mxu0 %v272
        %v369 = vpop.f32.mrb[0].mxu0
        %v370 = vadd.f32 0.0, %v369
        %v371 = vpop.f32.mrb[0].mxu0
        %372 = vmatprep.mubr.f32.mxu0 0.0
        %373 = vmatmul.mubr.f32.gmra.mrb[0].mxu0 %v275
        %v374 = vpop.f32.mrb[0].mxu0
        %v375 = vadd.f32 0.0, %v374
        %v376 = vpop.f32.mrb[0].mxu0
        %377 = vmatprep.mubr.f32.mxu0 0.0
        %378 = vmatmul.mubr.f32.gmra.mrb[0].mxu0 %v278
        %v379 = vpop.f32.mrb[0].mxu0
        %v380 = vadd.f32 0.0, %v379
        %v381 = vpop.f32.mrb[0].mxu0
        %382 = vmatprep.mubr.f32.mxu0 0.0
        %383 = vmatmul.mubr.f32.gmra.mrb[0].mxu0 %v281
        %v384 = vpop.f32.mrb[0].mxu0
        %v385 = vadd.f32 0.0, %v384
        %v386 = vpop.f32.mrb[0].mxu0
        %387 = vdwg.mxu0
        %388 = vxpose.xlu0.b32.start [1/16] %v350, 128
        %389 = vxpose.xlu0.b32.cont [2/16] %v355, 128
        %390 = vxpose.xlu0.b32.cont [3/16] 0.0, 128
        %391 = vxpose.xlu0.b32.cont [4/16] 0.0, 128
        %392 = vxpose.xlu0.b32.cont [5/16] 0.0, 128
        %393 = vxpose.xlu0.b32.cont [6/16] 0.0, 128
        %394 = vxpose.xlu0.b32.cont [7/16] 0.0, 128
        %395 = vxpose.xlu0.b32.cont [8/16] 0.0, 128
        %396 = vxpose.xlu0.b32.cont [9/16] 0.0, 128
        %397 = vxpose.xlu0.b32.cont [10/16] 0.0, 128
        %398 = vxpose.xlu0.b32.cont [11/16] 0.0, 128
        %399 = vxpose.xlu0.b32.cont [12/16] 0.0, 128
        %400 = vxpose.xlu0.b32.cont [13/16] 0.0, 128
        %401 = vxpose.xlu0.b32.cont [14/16] 0.0, 128
        %402 = vxpose.xlu0.b32.cont [15/16] 0.0, 128
        %403 = vxpose.xlu0.b32.end [16/16] 0.0, 128
        %v404 = vpop.trf.xlu0
        %v405 = vpop.trf.xlu0
        %v406 = vpop.trf.xlu0
        %v407 = vpop.trf.xlu0
        %v408 = vpop.trf.xlu0
        %v409 = vpop.trf.xlu0
        %v410 = vpop.trf.xlu0
        %v411 = vpop.trf.xlu0
        %v412 = vpop.trf.xlu0
        %v413 = vpop.trf.xlu0
        %v414 = vpop.trf.xlu0
        %v415 = vpop.trf.xlu0
        %v416 = vpop.trf.xlu0
        %v417 = vpop.trf.xlu0
        %v418 = vpop.trf.xlu0
        %v419 = vpop.trf.xlu0
        %420 = vxpose.xlu0.b32.start [1/16] %v360, 128
        %421 = vxpose.xlu0.b32.cont [2/16] %v365, 128
        %422 = vxpose.xlu0.b32.cont [3/16] 0.0, 128
        %423 = vxpose.xlu0.b32.cont [4/16] 0.0, 128
        %424 = vxpose.xlu0.b32.cont [5/16] 0.0, 128
        %425 = vxpose.xlu0.b32.cont [6/16] 0.0, 128
        %426 = vxpose.xlu0.b32.cont [7/16] 0.0, 128
        %427 = vxpose.xlu0.b32.cont [8/16] 0.0, 128
        %428 = vxpose.xlu0.b32.cont [9/16] 0.0, 128
        %429 = vxpose.xlu0.b32.cont [10/16] 0.0, 128
        %430 = vxpose.xlu0.b32.cont [11/16] 0.0, 128
        %431 = vxpose.xlu0.b32.cont [12/16] 0.0, 128
        %432 = vxpose.xlu0.b32.cont [13/16] 0.0, 128
        %433 = vxpose.xlu0.b32.cont [14/16] 0.0, 128
        %434 = vxpose.xlu0.b32.cont [15/16] 0.0, 128
        %435 = vxpose.xlu0.b32.end [16/16] 0.0, 128
        %v436 = vpop.trf.xlu0
        %v437 = vpop.trf.xlu0
        %v438 = vpop.trf.xlu0
        %v439 = vpop.trf.xlu0
        %v440 = vpop.trf.xlu0
        %v441 = vpop.trf.xlu0
        %v442 = vpop.trf.xlu0
        %v443 = vpop.trf.xlu0
        %v444 = vpop.trf.xlu0
        %v445 = vpop.trf.xlu0
        %v446 = vpop.trf.xlu0
        %v447 = vpop.trf.xlu0
        %v448 = vpop.trf.xlu0
        %v449 = vpop.trf.xlu0
        %v450 = vpop.trf.xlu0
        %v451 = vpop.trf.xlu0
        %452 = vxpose.xlu0.b32.start [1/16] %v370, 128
        %453 = vxpose.xlu0.b32.cont [2/16] %v375, 128
        %454 = vxpose.xlu0.b32.cont [3/16] 0.0, 128
        %455 = vxpose.xlu0.b32.cont [4/16] 0.0, 128
        %456 = vxpose.xlu0.b32.cont [5/16] 0.0, 128
        %457 = vxpose.xlu0.b32.cont [6/16] 0.0, 128
        %458 = vxpose.xlu0.b32.cont [7/16] 0.0, 128
        %459 = vxpose.xlu0.b32.cont [8/16] 0.0, 128
        %460 = vxpose.xlu0.b32.cont [9/16] 0.0, 128
        %461 = vxpose.xlu0.b32.cont [10/16] 0.0, 128
        %462 = vxpose.xlu0.b32.cont [11/16] 0.0, 128
        %463 = vxpose.xlu0.b32.cont [12/16] 0.0, 128
        %464 = vxpose.xlu0.b32.cont [13/16] 0.0, 128
        %465 = vxpose.xlu0.b32.cont [14/16] 0.0, 128
        %466 = vxpose.xlu0.b32.cont [15/16] 0.0, 128
        %467 = vxpose.xlu0.b32.end [16/16] 0.0, 128
        %v468 = vpop.trf.xlu0
        %v469 = vpop.trf.xlu0
        %v470 = vpop.trf.xlu0
        %v471 = vpop.trf.xlu0
        %v472 = vpop.trf.xlu0
        %v473 = vpop.trf.xlu0
        %v474 = vpop.trf.xlu0
        %v475 = vpop.trf.xlu0
        %v476 = vpop.trf.xlu0
        %v477 = vpop.trf.xlu0
        %v478 = vpop.trf.xlu0
        %v479 = vpop.trf.xlu0
        %v480 = vpop.trf.xlu0
        %v481 = vpop.trf.xlu0
        %v482 = vpop.trf.xlu0
        %v483 = vpop.trf.xlu0
        %484 = vxpose.xlu0.b32.start [1/16] %v380, 128
        %485 = vxpose.xlu0.b32.cont [2/16] %v385, 128
        %486 = vxpose.xlu0.b32.cont [3/16] 0.0, 128
        %487 = vxpose.xlu0.b32.cont [4/16] 0.0, 128
        %488 = vxpose.xlu0.b32.cont [5/16] 0.0, 128
        %489 = vxpose.xlu0.b32.cont [6/16] 0.0, 128
        %490 = vxpose.xlu0.b32.cont [7/16] 0.0, 128
        %491 = vxpose.xlu0.b32.cont [8/16] 0.0, 128
        %492 = vxpose.xlu0.b32.cont [9/16] 0.0, 128
        %493 = vxpose.xlu0.b32.cont [10/16] 0.0, 128
        %494 = vxpose.xlu0.b32.cont [11/16] 0.0, 128
        %495 = vxpose.xlu0.b32.cont [12/16] 0.0, 128
        %496 = vxpose.xlu0.b32.cont [13/16] 0.0, 128
        %497 = vxpose.xlu0.b32.cont [14/16] 0.0, 128
        %498 = vxpose.xlu0.b32.cont [15/16] 0.0, 128
        %499 = vxpose.xlu0.b32.end [16/16] 0.0, 128
        %v500 = vpop.trf.xlu0
        %v501 = vpop.trf.xlu0
        %v502 = vpop.trf.xlu0
        %v503 = vpop.trf.xlu0
        %v504 = vpop.trf.xlu0
        %v505 = vpop.trf.xlu0
        %v506 = vpop.trf.xlu0
        %v507 = vpop.trf.xlu0
        %v508 = vpop.trf.xlu0
        %v509 = vpop.trf.xlu0
        %v510 = vpop.trf.xlu0
        %v511 = vpop.trf.xlu0
        %v512 = vpop.trf.xlu0
        %v513 = vpop.trf.xlu0
        %v514 = vpop.trf.xlu0
        %v515 = vpop.trf.xlu0
        %v517 = vsel %vm258, %v404, 0
        %v520 = vsel %vm258, %v405, 0
        %v523 = vsel %vm258, %v406, 0
        %v526 = vsel %vm258, %v407, 0
        %v529 = vsel %vm258, %v436, 0
        %v532 = vsel %vm258, %v437, 0
        %v535 = vsel %vm258, %v438, 0
        %v538 = vsel %vm258, %v439, 0
        %v541 = vsel %vm258, %v468, 0
        %v544 = vsel %vm258, %v469, 0
        %v547 = vsel %vm258, %v470, 0
        %v550 = vsel %vm258, %v471, 0
        %v553 = vsel %vm258, %v500, 0
        %v556 = vsel %vm258, %v501, 0
        %v559 = vsel %vm258, %v502, 0
        %v562 = vsel %vm258, %v503, 0
        %564 = vmatprep.subr.mxu0 0.0
        %565 = vmatpush1.msra.mxu0 %v248
        %566 = vmatprep.subr.mxu0 0.0
        %567 = vmatpush1.msra.mxu0 %v249
        %568 = vmatprep.subr.mxu0 0.0
        %569 = vmatpush1.msra.mxu0 0.0
        %570 = vmatprep.subr.mxu0 0.0
        %571 = vmatpush1.msra.mxu0 0.0
        %572 = vmatprep.subr.mxu0 0.0
        %573 = vmatpush1.msra.mxu0 0.0
        %574 = vmatprep.subr.mxu0 0.0
        %575 = vmatpush1.msra.mxu0 0.0
        %576 = vmatprep.subr.mxu0 0.0
        %577 = vmatpush1.msra.mxu0 0.0
        %578 = vmatprep.subr.mxu0 0.0
        %579 = vmatpush1.msra.mxu0 0.0
        %580 = vmatprep.subr.mxu0 0.0
        %581 = vmatpush1.msra.mxu0 0.0
        %582 = vmatprep.subr.mxu0 0.0
        %583 = vmatpush1.msra.mxu0 0.0
        %584 = vmatprep.subr.mxu0 0.0
        %585 = vmatpush1.msra.mxu0 0.0
        %586 = vmatprep.subr.mxu0 0.0
        %587 = vmatpush1.msra.mxu0 0.0
        %588 = vmatprep.subr.mxu0 0.0
        %589 = vmatpush1.msra.mxu0 0.0
        %590 = vmatprep.subr.mxu0 0.0
        %591 = vmatpush1.msra.mxu0 0.0
        %592 = vmatprep.subr.mxu0 0.0
        %593 = vmatpush1.msra.mxu0 0.0
        %594 = vmatprep.subr.mxu0 0.0
        %595 = vmatpush1.msra.mxu0 0.0
        %596 = vmatprep.subr.mxu0 0.0
        %597 = vmatpush1.msra.mxu0 0.0
        %598 = vmatprep.subr.mxu0 0.0
        %599 = vmatpush1.msra.mxu0 0.0
        %600 = vmatprep.subr.mxu0 0.0
        %601 = vmatpush1.msra.mxu0 0.0
        %602 = vmatprep.subr.mxu0 0.0
        %603 = vmatpush1.msra.mxu0 0.0
        %604 = vmatprep.subr.mxu0 0.0
        %605 = vmatpush1.msra.mxu0 0.0
        %606 = vmatprep.subr.mxu0 0.0
        %607 = vmatpush1.msra.mxu0 0.0
        %608 = vmatprep.subr.mxu0 0.0
        %609 = vmatpush1.msra.mxu0 0.0
        %610 = vmatprep.subr.mxu0 0.0
        %611 = vmatpush1.msra.mxu0 0.0
        %612 = vmatprep.subr.mxu0 0.0
        %613 = vmatpush1.msra.mxu0 0.0
        %614 = vmatprep.subr.mxu0 0.0
        %615 = vmatpush1.msra.mxu0 0.0
        %616 = vmatprep.subr.mxu0 0.0
        %617 = vmatpush1.msra.mxu0 0.0
        %618 = vmatprep.subr.mxu0 0.0
        %619 = vmatpush1.msra.mxu0 0.0
        %620 = vmatprep.subr.mxu0 0.0
        %621 = vmatpush1.msra.mxu0 0.0
        %622 = vmatprep.subr.mxu0 0.0
        %623 = vmatpush1.msra.mxu0 0.0
        %624 = vmatprep.subr.mxu0 0.0
        %625 = vmatpush1.msra.mxu0 0.0
        %626 = vmatprep.subr.mxu0 0.0
        %627 = vmatpush1.msra.mxu0 0.0
        %628 = vmatprep.mubr.f32.mxu0 0.0
        %629 = vmatmul.mubr.f32.gmra.mrb[0].mxu0 %v517
        %v630 = vpop.f32.mrb[0].mxu0
        %v631 = vadd.f32 0.0, %v630
        %v632 = vpop.f32.mrb[0].mxu0
        %633 = vmatprep.mubr.f32.mxu0 0.0
        %634 = vmatmul.mubr.f32.gmra.mrb[0].mxu0 %v520
        %v635 = vpop.f32.mrb[0].mxu0
        %v636 = vadd.f32 0.0, %v635
        %v637 = vpop.f32.mrb[0].mxu0
        %638 = vmatprep.mubr.f32.mxu0 0.0
        %639 = vmatmul.mubr.f32.gmra.mrb[0].mxu0 %v523
        %v640 = vpop.f32.mrb[0].mxu0
        %v641 = vadd.f32 0.0, %v640
        %v642 = vpop.f32.mrb[0].mxu0
        %643 = vmatprep.mubr.f32.mxu0 0.0
        %644 = vmatmul.mubr.f32.gmra.mrb[0].mxu0 %v526
        %v645 = vpop.f32.mrb[0].mxu0
        %v646 = vadd.f32 0.0, %v645
        %v647 = vpop.f32.mrb[0].mxu0
        %648 = vmatprep.mubr.f32.mxu0 0.0
        %649 = vmatmul.mubr.f32.gmra.mrb[0].mxu0 %v529
        %v650 = vpop.f32.mrb[0].mxu0
        %v651 = vadd.f32 0.0, %v650
        %v652 = vpop.f32.mrb[0].mxu0
        %653 = vmatprep.mubr.f32.mxu0 0.0
        %654 = vmatmul.mubr.f32.gmra.mrb[0].mxu0 %v532
        %v655 = vpop.f32.mrb[0].mxu0
        %v656 = vadd.f32 0.0, %v655
        %v657 = vpop.f32.mrb[0].mxu0
        %658 = vmatprep.mubr.f32.mxu0 0.0
        %659 = vmatmul.mubr.f32.gmra.mrb[0].mxu0 %v535
        %v660 = vpop.f32.mrb[0].mxu0
        %v661 = vadd.f32 0.0, %v660
        %v662 = vpop.f32.mrb[0].mxu0
        %663 = vmatprep.mubr.f32.mxu0 0.0
        %664 = vmatmul.mubr.f32.gmra.mrb[0].mxu0 %v538
        %v665 = vpop.f32.mrb[0].mxu0
        %v666 = vadd.f32 0.0, %v665
        %v667 = vpop.f32.mrb[0].mxu0
        %668 = vmatprep.mubr.f32.mxu0 0.0
        %669 = vmatmul.mubr.f32.gmra.mrb[0].mxu0 %v541
        %v670 = vpop.f32.mrb[0].mxu0
        %v671 = vadd.f32 0.0, %v670
        %v672 = vpop.f32.mrb[0].mxu0
        %673 = vmatprep.mubr.f32.mxu0 0.0
        %674 = vmatmul.mubr.f32.gmra.mrb[0].mxu0 %v544
        %v675 = vpop.f32.mrb[0].mxu0
        %v676 = vadd.f32 0.0, %v675
        %v677 = vpop.f32.mrb[0].mxu0
        %678 = vmatprep.mubr.f32.mxu0 0.0
        %679 = vmatmul.mubr.f32.gmra.mrb[0].mxu0 %v547
        %v680 = vpop.f32.mrb[0].mxu0
        %v681 = vadd.f32 0.0, %v680
        %v682 = vpop.f32.mrb[0].mxu0
        %683 = vmatprep.mubr.f32.mxu0 0.0
        %684 = vmatmul.mubr.f32.gmra.mrb[0].mxu0 %v550
        %v685 = vpop.f32.mrb[0].mxu0
        %v686 = vadd.f32 0.0, %v685
        %v687 = vpop.f32.mrb[0].mxu0
        %688 = vmatprep.mubr.f32.mxu0 0.0
        %689 = vmatmul.mubr.f32.gmra.mrb[0].mxu0 %v553
        %v690 = vpop.f32.mrb[0].mxu0
        %v691 = vadd.f32 0.0, %v690
        %v692 = vpop.f32.mrb[0].mxu0
        %693 = vmatprep.mubr.f32.mxu0 0.0
        %694 = vmatmul.mubr.f32.gmra.mrb[0].mxu0 %v556
        %v695 = vpop.f32.mrb[0].mxu0
        %v696 = vadd.f32 0.0, %v695
        %v697 = vpop.f32.mrb[0].mxu0
        %698 = vmatprep.mubr.f32.mxu0 0.0
        %699 = vmatmul.mubr.f32.gmra.mrb[0].mxu0 %v559
        %v700 = vpop.f32.mrb[0].mxu0
        %v701 = vadd.f32 0.0, %v700
        %v702 = vpop.f32.mrb[0].mxu0
        %703 = vmatprep.mubr.f32.mxu0 0.0
        %704 = vmatmul.mubr.f32.gmra.mrb[0].mxu0 %v562
        %v705 = vpop.f32.mrb[0].mxu0
        %v706 = vadd.f32 0.0, %v705
        %v707 = vpop.f32.mrb[0].mxu0
        %708 = vdwg.mxu0
        %717 = vrot.lane.b32.xlu0 %v641, 112
        %v718 = vpop.permute.xlu0 %717
        %719 = vrot.lane.b32.xlu0 %v646, 112
        %v720 = vpop.permute.xlu0 %719
        %721 = vrot.lane.b32.xlu0 %v661, 112
        %v722 = vpop.permute.xlu0 %721
        %723 = vrot.lane.b32.xlu0 %v666, 112
        %v724 = vpop.permute.xlu0 %723
        %725 = vrot.lane.b32.xlu0 %v681, 112
        %v726 = vpop.permute.xlu0 %725
        %727 = vrot.lane.b32.xlu0 %v686, 112
        %v728 = vpop.permute.xlu0 %727
        %729 = vrot.lane.b32.xlu0 %v701, 112
        %v730 = vpop.permute.xlu0 %729
        %731 = vrot.lane.b32.xlu0 %v706, 112
        %v732 = vpop.permute.xlu0 %731
        %v741 = vsub.f32 %v631, %v718
        %v742 = vsub.f32 %v636, %v720
        %v743 = vsub.f32 %v651, %v722
        %v744 = vsub.f32 %v656, %v724
        %v745 = vsub.f32 %v671, %v726
        %v746 = vsub.f32 %v676, %v728
        %v747 = vsub.f32 %v691, %v730
        %v748 = vsub.f32 %v696, %v732
        %749 = vrot.lane.b32.xlu0 %v641, 16
        %v750 = vpop.permute.xlu0 %749
        %751 = vrot.lane.b32.xlu0 %v646, 16
        %v752 = vpop.permute.xlu0 %751
        %753 = vrot.lane.b32.xlu0 %v661, 16
        %v754 = vpop.permute.xlu0 %753
        %755 = vrot.lane.b32.xlu0 %v666, 16
        %v756 = vpop.permute.xlu0 %755
        %757 = vrot.lane.b32.xlu0 %v681, 16
        %v758 = vpop.permute.xlu0 %757
        %759 = vrot.lane.b32.xlu0 %v686, 16
        %v760 = vpop.permute.xlu0 %759
        %761 = vrot.lane.b32.xlu0 %v701, 16
        %v762 = vpop.permute.xlu0 %761
        %763 = vrot.lane.b32.xlu0 %v706, 16
        %v764 = vpop.permute.xlu0 %763
        %v773 = vadd.f32 %v631, %v750
        %v774 = vadd.f32 %v636, %v752
        %v775 = vadd.f32 %v651, %v754
        %v776 = vadd.f32 %v656, %v756
        %v777 = vadd.f32 %v671, %v758
        %v778 = vadd.f32 %v676, %v760
        %v779 = vadd.f32 %v691, %v762
        %v780 = vadd.f32 %v696, %v764
        %v781 = vld [vmem:[#allocation5] sm:$0xff]
        %v782 = vld [vmem:[#allocation5 + $0x8] sm:$0xff]
        %v783 = vld [vmem:[#allocation5 + $0x10] sm:$0xff]
        %v784 = vld [vmem:[#allocation5 + $0x18] sm:$0xff]
        %v785 = vld [vmem:[#allocation5 + $0x20] sm:$0xff]
        %v786 = vld [vmem:[#allocation5 + $0x28] sm:$0xff]
        %v787 = vld [vmem:[#allocation5 + $0x30] sm:$0xff]
        %v788 = vld [vmem:[#allocation5 + $0x38] sm:$0xff]
        %v789 = vld [vmem:[#allocation5 + $0x40] sm:$0xff]
        %v790 = vld [vmem:[#allocation5 + $0x48] sm:$0xff]
        %v791 = vld [vmem:[#allocation5 + $0x50] sm:$0xff]
        %v792 = vld [vmem:[#allocation5 + $0x58] sm:$0xff]
        %v793 = vld [vmem:[#allocation5 + $0x60] sm:$0xff]
        %v794 = vld [vmem:[#allocation5 + $0x68] sm:$0xff]
        %v795 = vld [vmem:[#allocation5 + $0x70] sm:$0xff]
        %v796 = vld [vmem:[#allocation5 + $0x78] sm:$0xff]
        %v797 = vmul.f32 %v741, %v781
        %v798 = vmul.f32 %v742, %v782
        %v799 = vmul.f32 %v743, %v783
        %v800 = vmul.f32 %v744, %v784
        %v801 = vmul.f32 %v745, %v785
        %v802 = vmul.f32 %v746, %v786
        %v803 = vmul.f32 %v747, %v787
        %v804 = vmul.f32 %v748, %v788
        %813 = vrot.lane.b32.xlu0 %v789, 16
        %v814 = vpop.permute.xlu0 %813
        %815 = vrot.lane.b32.xlu0 %v790, 16
        %v816 = vpop.permute.xlu0 %815
        %817 = vrot.lane.b32.xlu0 %v791, 16
        %v818 = vpop.permute.xlu0 %817
        %819 = vrot.lane.b32.xlu0 %v792, 16
        %v820 = vpop.permute.xlu0 %819
        %821 = vrot.lane.b32.xlu0 %v793, 16
        %v822 = vpop.permute.xlu0 %821
        %823 = vrot.lane.b32.xlu0 %v794, 16
        %v824 = vpop.permute.xlu0 %823
        %825 = vrot.lane.b32.xlu0 %v795, 16
        %v826 = vpop.permute.xlu0 %825
        %827 = vrot.lane.b32.xlu0 %v796, 16
        %v828 = vpop.permute.xlu0 %827
        %v837 = vmul.f32 %v773, %v814
        %v838 = vmul.f32 %v774, %v816
        %v839 = vmul.f32 %v775, %v818
        %v840 = vmul.f32 %v776, %v820
        %v841 = vmul.f32 %v777, %v822
        %v842 = vmul.f32 %v778, %v824
        %v843 = vmul.f32 %v779, %v826
        %v844 = vmul.f32 %v780, %v828
        %853 = vrot.lane.b32.xlu0 %v837, 112
        %v854 = vpop.permute.xlu0 %853
        %855 = vrot.lane.b32.xlu0 %v838, 112
        %v856 = vpop.permute.xlu0 %855
        %857 = vrot.lane.b32.xlu0 %v839, 112
        %v858 = vpop.permute.xlu0 %857
        %859 = vrot.lane.b32.xlu0 %v840, 112
        %v860 = vpop.permute.xlu0 %859
        %861 = vrot.lane.b32.xlu0 %v841, 112
        %v862 = vpop.permute.xlu0 %861
        %863 = vrot.lane.b32.xlu0 %v842, 112
        %v864 = vpop.permute.xlu0 %863
        %865 = vrot.lane.b32.xlu0 %v843, 112
        %v866 = vpop.permute.xlu0 %865
        %867 = vrot.lane.b32.xlu0 %v844, 112
        %v868 = vpop.permute.xlu0 %867
        %v877 = vsub.f32 %v797, %v854
        %v878 = vsub.f32 %v798, %v856
        %v879 = vsub.f32 %v799, %v858
        %v880 = vsub.f32 %v800, %v860
        %v881 = vsub.f32 %v801, %v862
        %v882 = vsub.f32 %v802, %v864
        %v883 = vsub.f32 %v803, %v866
        %v884 = vsub.f32 %v804, %v868
        %v885 = vmul.f32 %v741, %v789
        %v886 = vmul.f32 %v742, %v790
        %v887 = vmul.f32 %v743, %v791
        %v888 = vmul.f32 %v744, %v792
        %v889 = vmul.f32 %v745, %v793
        %v890 = vmul.f32 %v746, %v794
        %v891 = vmul.f32 %v747, %v795
        %v892 = vmul.f32 %v748, %v796
        %901 = vrot.lane.b32.xlu0 %v781, 16
        %v902 = vpop.permute.xlu0 %901
        %903 = vrot.lane.b32.xlu0 %v782, 16
        %v904 = vpop.permute.xlu0 %903
        %905 = vrot.lane.b32.xlu0 %v783, 16
        %v906 = vpop.permute.xlu0 %905
        %907 = vrot.lane.b32.xlu0 %v784, 16
        %v908 = vpop.permute.xlu0 %907
        %909 = vrot.lane.b32.xlu0 %v785, 16
        %v910 = vpop.permute.xlu0 %909
        %911 = vrot.lane.b32.xlu0 %v786, 16
        %v912 = vpop.permute.xlu0 %911
        %913 = vrot.lane.b32.xlu0 %v787, 16
        %v914 = vpop.permute.xlu0 %913
        %915 = vrot.lane.b32.xlu0 %v788, 16
        %v916 = vpop.permute.xlu0 %915
        %v925 = vmul.f32 %v773, %v902
        %v926 = vmul.f32 %v774, %v904
        %v927 = vmul.f32 %v775, %v906
        %v928 = vmul.f32 %v776, %v908
        %v929 = vmul.f32 %v777, %v910
        %v930 = vmul.f32 %v778, %v912
        %v931 = vmul.f32 %v779, %v914
        %v932 = vmul.f32 %v780, %v916
        %941 = vrot.lane.b32.xlu0 %v925, 112
        %v942 = vpop.permute.xlu0 %941
        %943 = vrot.lane.b32.xlu0 %v926, 112
        %v944 = vpop.permute.xlu0 %943
        %945 = vrot.lane.b32.xlu0 %v927, 112
        %v946 = vpop.permute.xlu0 %945
        %947 = vrot.lane.b32.xlu0 %v928, 112
        %v948 = vpop.permute.xlu0 %947
        %949 = vrot.lane.b32.xlu0 %v929, 112
        %v950 = vpop.permute.xlu0 %949
        %951 = vrot.lane.b32.xlu0 %v930, 112
        %v952 = vpop.permute.xlu0 %951
        %953 = vrot.lane.b32.xlu0 %v931, 112
        %v954 = vpop.permute.xlu0 %953
        %955 = vrot.lane.b32.xlu0 %v932, 112
        %v956 = vpop.permute.xlu0 %955
        %v965 = vadd.f32 %v885, %v942
        %v966 = vadd.f32 %v886, %v944
        %v967 = vadd.f32 %v887, %v946
        %v968 = vadd.f32 %v888, %v948
        %v969 = vadd.f32 %v889, %v950
        %v970 = vadd.f32 %v890, %v952
        %v971 = vadd.f32 %v891, %v954
        %v972 = vadd.f32 %v892, %v956
        %v974 = vsel %vm258, %v877, 0
        %v977 = vsel %vm258, %v878, 0
        %v980 = vsel %vm258, %v965, 0
        %v983 = vsel %vm258, %v966, 0
        %v986 = vsel %vm258, %v879, 0
        %v989 = vsel %vm258, %v880, 0
        %v992 = vsel %vm258, %v967, 0
        %v995 = vsel %vm258, %v968, 0
        %v998 = vsel %vm258, %v881, 0
        %v1001 = vsel %vm258, %v882, 0
        %v1004 = vsel %vm258, %v969, 0
        %v1007 = vsel %vm258, %v970, 0
        %v1010 = vsel %vm258, %v883, 0
        %v1013 = vsel %vm258, %v884, 0
        %v1016 = vsel %vm258, %v971, 0
        %v1019 = vsel %vm258, %v972, 0
        %1021 = vmatprep.subr.mxu0 0.0
        %1022 = vmatpush1.msra.mxu0 %v248
        %1023 = vmatprep.subr.mxu0 0.0
        %1024 = vmatpush1.msra.mxu0 %v249
        %1025 = vmatprep.subr.mxu0 0.0
        %1026 = vmatpush1.msra.mxu0 0.0
        %1027 = vmatprep.subr.mxu0 0.0
        %1028 = vmatpush1.msra.mxu0 0.0
        %1029 = vmatprep.subr.mxu0 0.0
        %1030 = vmatpush1.msra.mxu0 0.0
        %1031 = vmatprep.subr.mxu0 0.0
        %1032 = vmatpush1.msra.mxu0 0.0
        %1033 = vmatprep.subr.mxu0 0.0
        %1034 = vmatpush1.msra.mxu0 0.0
        %1035 = vmatprep.subr.mxu0 0.0
        %1036 = vmatpush1.msra.mxu0 0.0
        %1037 = vmatprep.subr.mxu0 0.0
        %1038 = vmatpush1.msra.mxu0 0.0
        %1039 = vmatprep.subr.mxu0 0.0
        %1040 = vmatpush1.msra.mxu0 0.0
        %1041 = vmatprep.subr.mxu0 0.0
        %1042 = vmatpush1.msra.mxu0 0.0
        %1043 = vmatprep.subr.mxu0 0.0
        %1044 = vmatpush1.msra.mxu0 0.0
        %1045 = vmatprep.subr.mxu0 0.0
        %1046 = vmatpush1.msra.mxu0 0.0
        %1047 = vmatprep.subr.mxu0 0.0
        %1048 = vmatpush1.msra.mxu0 0.0
        %1049 = vmatprep.subr.mxu0 0.0
        %1050 = vmatpush1.msra.mxu0 0.0
        %1051 = vmatprep.subr.mxu0 0.0
        %1052 = vmatpush1.msra.mxu0 0.0
        %1053 = vmatprep.subr.mxu0 0.0
        %1054 = vmatpush1.msra.mxu0 0.0
        %1055 = vmatprep.subr.mxu0 0.0
        %1056 = vmatpush1.msra.mxu0 0.0
        %1057 = vmatprep.subr.mxu0 0.0
        %1058 = vmatpush1.msra.mxu0 0.0
        %1059 = vmatprep.subr.mxu0 0.0
        %1060 = vmatpush1.msra.mxu0 0.0
        %1061 = vmatprep.subr.mxu0 0.0
        %1062 = vmatpush1.msra.mxu0 0.0
        %1063 = vmatprep.subr.mxu0 0.0
        %1064 = vmatpush1.msra.mxu0 0.0
        %1065 = vmatprep.subr.mxu0 0.0
        %1066 = vmatpush1.msra.mxu0 0.0
        %1067 = vmatprep.subr.mxu0 0.0
        %1068 = vmatpush1.msra.mxu0 0.0
        %1069 = vmatprep.subr.mxu0 0.0
        %1070 = vmatpush1.msra.mxu0 0.0
        %1071 = vmatprep.subr.mxu0 0.0
        %1072 = vmatpush1.msra.mxu0 0.0
        %1073 = vmatprep.subr.mxu0 0.0
        %1074 = vmatpush1.msra.mxu0 0.0
        %1075 = vmatprep.subr.mxu0 0.0
        %1076 = vmatpush1.msra.mxu0 0.0
        %1077 = vmatprep.subr.mxu0 0.0
        %1078 = vmatpush1.msra.mxu0 0.0
        %1079 = vmatprep.subr.mxu0 0.0
        %1080 = vmatpush1.msra.mxu0 0.0
        %1081 = vmatprep.subr.mxu0 0.0
        %1082 = vmatpush1.msra.mxu0 0.0
        %1083 = vmatprep.subr.mxu0 0.0
        %1084 = vmatpush1.msra.mxu0 0.0
        %1085 = vmatprep.mubr.f32.mxu0 0.0
        %1086 = vmatmul.mubr.f32.gmra.mrb[0].mxu0 %v974
        %v1087 = vpop.f32.mrb[0].mxu0
        %v1088 = vadd.f32 0.0, %v1087
        %v1089 = vpop.f32.mrb[0].mxu0
        %1090 = vmatprep.mubr.f32.mxu0 0.0
        %1091 = vmatmul.mubr.f32.gmra.mrb[0].mxu0 %v977
        %v1092 = vpop.f32.mrb[0].mxu0
        %v1093 = vadd.f32 0.0, %v1092
        %v1094 = vpop.f32.mrb[0].mxu0
        %1095 = vmatprep.mubr.f32.mxu0 0.0
        %1096 = vmatmul.mubr.f32.gmra.mrb[0].mxu0 %v980
        %v1097 = vpop.f32.mrb[0].mxu0
        %v1098 = vadd.f32 0.0, %v1097
        %v1099 = vpop.f32.mrb[0].mxu0
        %1100 = vmatprep.mubr.f32.mxu0 0.0
        %1101 = vmatmul.mubr.f32.gmra.mrb[0].mxu0 %v983
        %v1102 = vpop.f32.mrb[0].mxu0
        %v1103 = vadd.f32 0.0, %v1102
        %v1104 = vpop.f32.mrb[0].mxu0
        %1105 = vmatprep.mubr.f32.mxu0 0.0
        %1106 = vmatmul.mubr.f32.gmra.mrb[0].mxu0 %v986
        %v1107 = vpop.f32.mrb[0].mxu0
        %v1108 = vadd.f32 0.0, %v1107
        %v1109 = vpop.f32.mrb[0].mxu0
        %1110 = vmatprep.mubr.f32.mxu0 0.0
        %1111 = vmatmul.mubr.f32.gmra.mrb[0].mxu0 %v989
        %v1112 = vpop.f32.mrb[0].mxu0
        %v1113 = vadd.f32 0.0, %v1112
        %v1114 = vpop.f32.mrb[0].mxu0
        %1115 = vmatprep.mubr.f32.mxu0 0.0
        %1116 = vmatmul.mubr.f32.gmra.mrb[0].mxu0 %v992
        %v1117 = vpop.f32.mrb[0].mxu0
        %v1118 = vadd.f32 0.0, %v1117
        %v1119 = vpop.f32.mrb[0].mxu0
        %1120 = vmatprep.mubr.f32.mxu0 0.0
        %1121 = vmatmul.mubr.f32.gmra.mrb[0].mxu0 %v995
        %v1122 = vpop.f32.mrb[0].mxu0
        %v1123 = vadd.f32 0.0, %v1122
        %v1124 = vpop.f32.mrb[0].mxu0
        %1125 = vmatprep.mubr.f32.mxu0 0.0
        %1126 = vmatmul.mubr.f32.gmra.mrb[0].mxu0 %v998
        %v1127 = vpop.f32.mrb[0].mxu0
        %v1128 = vadd.f32 0.0, %v1127
        %v1129 = vpop.f32.mrb[0].mxu0
        %1130 = vmatprep.mubr.f32.mxu0 0.0
        %1131 = vmatmul.mubr.f32.gmra.mrb[0].mxu0 %v1001
        %v1132 = vpop.f32.mrb[0].mxu0
        %v1133 = vadd.f32 0.0, %v1132
        %v1134 = vpop.f32.mrb[0].mxu0
        %1135 = vmatprep.mubr.f32.mxu0 0.0
        %1136 = vmatmul.mubr.f32.gmra.mrb[0].mxu0 %v1004
        %v1137 = vpop.f32.mrb[0].mxu0
        %v1138 = vadd.f32 0.0, %v1137
        %v1139 = vpop.f32.mrb[0].mxu0
        %1140 = vmatprep.mubr.f32.mxu0 0.0
        %1141 = vmatmul.mubr.f32.gmra.mrb[0].mxu0 %v1007
        %v1142 = vpop.f32.mrb[0].mxu0
        %v1143 = vadd.f32 0.0, %v1142
        %v1144 = vpop.f32.mrb[0].mxu0
        %1145 = vmatprep.mubr.f32.mxu0 0.0
        %1146 = vmatmul.mubr.f32.gmra.mrb[0].mxu0 %v1010
        %v1147 = vpop.f32.mrb[0].mxu0
        %v1148 = vadd.f32 0.0, %v1147
        %v1149 = vpop.f32.mrb[0].mxu0
        %1150 = vmatprep.mubr.f32.mxu0 0.0
        %1151 = vmatmul.mubr.f32.gmra.mrb[0].mxu0 %v1013
        %v1152 = vpop.f32.mrb[0].mxu0
        %v1153 = vadd.f32 0.0, %v1152
        %v1154 = vpop.f32.mrb[0].mxu0
        %1155 = vmatprep.mubr.f32.mxu0 0.0
        %1156 = vmatmul.mubr.f32.gmra.mrb[0].mxu0 %v1016
        %v1157 = vpop.f32.mrb[0].mxu0
        %v1158 = vadd.f32 0.0, %v1157
        %v1159 = vpop.f32.mrb[0].mxu0
        %1160 = vmatprep.mubr.f32.mxu0 0.0
        %1161 = vmatmul.mubr.f32.gmra.mrb[0].mxu0 %v1019
        %v1162 = vpop.f32.mrb[0].mxu0
        %v1163 = vadd.f32 0.0, %v1162
        %v1164 = vpop.f32.mrb[0].mxu0
        %1165 = vdwg.mxu0
        %1174 = vrot.lane.b32.xlu0 %v1098, 112
        %v1175 = vpop.permute.xlu0 %1174
        %1176 = vrot.lane.b32.xlu0 %v1103, 112
        %v1177 = vpop.permute.xlu0 %1176
        %1178 = vrot.lane.b32.xlu0 %v1118, 112
        %v1179 = vpop.permute.xlu0 %1178
        %1180 = vrot.lane.b32.xlu0 %v1123, 112
        %v1181 = vpop.permute.xlu0 %1180
        %1182 = vrot.lane.b32.xlu0 %v1138, 112
        %v1183 = vpop.permute.xlu0 %1182
        %1184 = vrot.lane.b32.xlu0 %v1143, 112
        %v1185 = vpop.permute.xlu0 %1184
        %1186 = vrot.lane.b32.xlu0 %v1158, 112
        %v1187 = vpop.permute.xlu0 %1186
        %1188 = vrot.lane.b32.xlu0 %v1163, 112
        %v1189 = vpop.permute.xlu0 %1188
        %v1198 = vadd.f32 %v1088, %v1175
        %v1199 = vadd.f32 %v1093, %v1177
        %v1200 = vadd.f32 %v1108, %v1179
        %v1201 = vadd.f32 %v1113, %v1181
        %v1202 = vadd.f32 %v1128, %v1183
        %v1203 = vadd.f32 %v1133, %v1185
        %v1204 = vadd.f32 %v1148, %v1187
        %v1205 = vadd.f32 %v1153, %v1189
        %1214 = vrot.lane.b32.xlu0 %v1088, 112
        %v1215 = vpop.permute.xlu0 %1214
        %1216 = vrot.lane.b32.xlu0 %v1093, 112
        %v1217 = vpop.permute.xlu0 %1216
        %1218 = vrot.lane.b32.xlu0 %v1108, 112
        %v1219 = vpop.permute.xlu0 %1218
        %1220 = vrot.lane.b32.xlu0 %v1113, 112
        %v1221 = vpop.permute.xlu0 %1220
        %1222 = vrot.lane.b32.xlu0 %v1128, 112
        %v1223 = vpop.permute.xlu0 %1222
        %1224 = vrot.lane.b32.xlu0 %v1133, 112
        %v1225 = vpop.permute.xlu0 %1224
        %1226 = vrot.lane.b32.xlu0 %v1148, 112
        %v1227 = vpop.permute.xlu0 %1226
        %1228 = vrot.lane.b32.xlu0 %v1153, 112
        %v1229 = vpop.permute.xlu0 %1228
        %v1238 = vsub.f32 %v1098, %v1215
        %v1239 = vsub.f32 %v1103, %v1217
        %v1240 = vsub.f32 %v1118, %v1219
        %v1241 = vsub.f32 %v1123, %v1221
        %v1242 = vsub.f32 %v1138, %v1223
        %v1243 = vsub.f32 %v1143, %v1225
        %v1244 = vsub.f32 %v1158, %v1227
        %v1245 = vsub.f32 %v1163, %v1229
        %1246 = vxpose.xlu0.b32.start [1/16] %v1198, 128
        %1247 = vxpose.xlu0.b32.cont [2/16] %v1199, 128
        %1248 = vxpose.xlu0.b32.cont [3/16] 0.0, 128
        %1249 = vxpose.xlu0.b32.cont [4/16] 0.0, 128
        %1250 = vxpose.xlu0.b32.cont [5/16] 0.0, 128
        %1251 = vxpose.xlu0.b32.cont [6/16] 0.0, 128
        %1252 = vxpose.xlu0.b32.cont [7/16] 0.0, 128
        %1253 = vxpose.xlu0.b32.cont [8/16] 0.0, 128
        %1254 = vxpose.xlu0.b32.cont [9/16] 0.0, 128
        %1255 = vxpose.xlu0.b32.cont [10/16] 0.0, 128
        %1256 = vxpose.xlu0.b32.cont [11/16] 0.0, 128
        %1257 = vxpose.xlu0.b32.cont [12/16] 0.0, 128
        %1258 = vxpose.xlu0.b32.cont [13/16] 0.0, 128
        %1259 = vxpose.xlu0.b32.cont [14/16] 0.0, 128
        %1260 = vxpose.xlu0.b32.cont [15/16] 0.0, 128
        %1261 = vxpose.xlu0.b32.end [16/16] 0.0, 128
        %v1262 = vpop.trf.xlu0
        %v1263 = vpop.trf.xlu0
        %v1264 = vpop.trf.xlu0
        %v1265 = vpop.trf.xlu0
        %v1266 = vpop.trf.xlu0
        %v1267 = vpop.trf.xlu0
        %v1268 = vpop.trf.xlu0
        %v1269 = vpop.trf.xlu0
        %v1270 = vpop.trf.xlu0
        %v1271 = vpop.trf.xlu0
        %v1272 = vpop.trf.xlu0
        %v1273 = vpop.trf.xlu0
        %v1274 = vpop.trf.xlu0
        %v1275 = vpop.trf.xlu0
        %v1276 = vpop.trf.xlu0
        %v1277 = vpop.trf.xlu0
        %1278 = vxpose.xlu0.b32.start [1/16] %v1238, 128
        %1279 = vxpose.xlu0.b32.cont [2/16] %v1239, 128
        %1280 = vxpose.xlu0.b32.cont [3/16] 0.0, 128
        %1281 = vxpose.xlu0.b32.cont [4/16] 0.0, 128
        %1282 = vxpose.xlu0.b32.cont [5/16] 0.0, 128
        %1283 = vxpose.xlu0.b32.cont [6/16] 0.0, 128
        %1284 = vxpose.xlu0.b32.cont [7/16] 0.0, 128
        %1285 = vxpose.xlu0.b32.cont [8/16] 0.0, 128
        %1286 = vxpose.xlu0.b32.cont [9/16] 0.0, 128
        %1287 = vxpose.xlu0.b32.cont [10/16] 0.0, 128
        %1288 = vxpose.xlu0.b32.cont [11/16] 0.0, 128
        %1289 = vxpose.xlu0.b32.cont [12/16] 0.0, 128
        %1290 = vxpose.xlu0.b32.cont [13/16] 0.0, 128
        %1291 = vxpose.xlu0.b32.cont [14/16] 0.0, 128
        %1292 = vxpose.xlu0.b32.cont [15/16] 0.0, 128
        %1293 = vxpose.xlu0.b32.end [16/16] 0.0, 128
        %v1294 = vpop.trf.xlu0
        %v1295 = vpop.trf.xlu0
        %v1296 = vpop.trf.xlu0
        %v1297 = vpop.trf.xlu0
        %v1298 = vpop.trf.xlu0
        %v1299 = vpop.trf.xlu0
        %v1300 = vpop.trf.xlu0
        %v1301 = vpop.trf.xlu0
        %v1302 = vpop.trf.xlu0
        %v1303 = vpop.trf.xlu0
        %v1304 = vpop.trf.xlu0
        %v1305 = vpop.trf.xlu0
        %v1306 = vpop.trf.xlu0
        %v1307 = vpop.trf.xlu0
        %v1308 = vpop.trf.xlu0
        %v1309 = vpop.trf.xlu0
        %1310 = vxpose.xlu0.b32.start [1/16] %v1200, 128
        %1311 = vxpose.xlu0.b32.cont [2/16] %v1201, 128
        %1312 = vxpose.xlu0.b32.cont [3/16] 0.0, 128
        %1313 = vxpose.xlu0.b32.cont [4/16] 0.0, 128
        %1314 = vxpose.xlu0.b32.cont [5/16] 0.0, 128
        %1315 = vxpose.xlu0.b32.cont [6/16] 0.0, 128
        %1316 = vxpose.xlu0.b32.cont [7/16] 0.0, 128
        %1317 = vxpose.xlu0.b32.cont [8/16] 0.0, 128
        %1318 = vxpose.xlu0.b32.cont [9/16] 0.0, 128
        %1319 = vxpose.xlu0.b32.cont [10/16] 0.0, 128
        %1320 = vxpose.xlu0.b32.cont [11/16] 0.0, 128
        %1321 = vxpose.xlu0.b32.cont [12/16] 0.0, 128
        %1322 = vxpose.xlu0.b32.cont [13/16] 0.0, 128
        %1323 = vxpose.xlu0.b32.cont [14/16] 0.0, 128
        %1324 = vxpose.xlu0.b32.cont [15/16] 0.0, 128
        %1325 = vxpose.xlu0.b32.end [16/16] 0.0, 128
        %v1326 = vpop.trf.xlu0
        %v1327 = vpop.trf.xlu0
        %v1328 = vpop.trf.xlu0
        %v1329 = vpop.trf.xlu0
        %v1330 = vpop.trf.xlu0
        %v1331 = vpop.trf.xlu0
        %v1332 = vpop.trf.xlu0
        %v1333 = vpop.trf.xlu0
        %v1334 = vpop.trf.xlu0
        %v1335 = vpop.trf.xlu0
        %v1336 = vpop.trf.xlu0
        %v1337 = vpop.trf.xlu0
        %v1338 = vpop.trf.xlu0
        %v1339 = vpop.trf.xlu0
        %v1340 = vpop.trf.xlu0
        %v1341 = vpop.trf.xlu0
        %1342 = vxpose.xlu0.b32.start [1/16] %v1240, 128
        %1343 = vxpose.xlu0.b32.cont [2/16] %v1241, 128
        %1344 = vxpose.xlu0.b32.cont [3/16] 0.0, 128
        %1345 = vxpose.xlu0.b32.cont [4/16] 0.0, 128
        %1346 = vxpose.xlu0.b32.cont [5/16] 0.0, 128
        %1347 = vxpose.xlu0.b32.cont [6/16] 0.0, 128
        %1348 = vxpose.xlu0.b32.cont [7/16] 0.0, 128
        %1349 = vxpose.xlu0.b32.cont [8/16] 0.0, 128
        %1350 = vxpose.xlu0.b32.cont [9/16] 0.0, 128
        %1351 = vxpose.xlu0.b32.cont [10/16] 0.0, 128
        %1352 = vxpose.xlu0.b32.cont [11/16] 0.0, 128
        %1353 = vxpose.xlu0.b32.cont [12/16] 0.0, 128
        %1354 = vxpose.xlu0.b32.cont [13/16] 0.0, 128
        %1355 = vxpose.xlu0.b32.cont [14/16] 0.0, 128
        %1356 = vxpose.xlu0.b32.cont [15/16] 0.0, 128
        %1357 = vxpose.xlu0.b32.end [16/16] 0.0, 128
        %v1358 = vpop.trf.xlu0
        %v1359 = vpop.trf.xlu0
        %v1360 = vpop.trf.xlu0
        %v1361 = vpop.trf.xlu0
        %v1362 = vpop.trf.xlu0
        %v1363 = vpop.trf.xlu0
        %v1364 = vpop.trf.xlu0
        %v1365 = vpop.trf.xlu0
        %v1366 = vpop.trf.xlu0
        %v1367 = vpop.trf.xlu0
        %v1368 = vpop.trf.xlu0
        %v1369 = vpop.trf.xlu0
        %v1370 = vpop.trf.xlu0
        %v1371 = vpop.trf.xlu0
        %v1372 = vpop.trf.xlu0
        %v1373 = vpop.trf.xlu0
        %1374 = vxpose.xlu0.b32.start [1/16] %v1202, 128
        %1375 = vxpose.xlu0.b32.cont [2/16] %v1203, 128
        %1376 = vxpose.xlu0.b32.cont [3/16] 0.0, 128
        %1377 = vxpose.xlu0.b32.cont [4/16] 0.0, 128
        %1378 = vxpose.xlu0.b32.cont [5/16] 0.0, 128
        %1379 = vxpose.xlu0.b32.cont [6/16] 0.0, 128
        %1380 = vxpose.xlu0.b32.cont [7/16] 0.0, 128
        %1381 = vxpose.xlu0.b32.cont [8/16] 0.0, 128
        %1382 = vxpose.xlu0.b32.cont [9/16] 0.0, 128
        %1383 = vxpose.xlu0.b32.cont [10/16] 0.0, 128
        %1384 = vxpose.xlu0.b32.cont [11/16] 0.0, 128
        %1385 = vxpose.xlu0.b32.cont [12/16] 0.0, 128
        %1386 = vxpose.xlu0.b32.cont [13/16] 0.0, 128
        %1387 = vxpose.xlu0.b32.cont [14/16] 0.0, 128
        %1388 = vxpose.xlu0.b32.cont [15/16] 0.0, 128
        %1389 = vxpose.xlu0.b32.end [16/16] 0.0, 128
        %v1390 = vpop.trf.xlu0
        %v1391 = vpop.trf.xlu0
        %v1392 = vpop.trf.xlu0
        %v1393 = vpop.trf.xlu0
        %v1394 = vpop.trf.xlu0
        %v1395 = vpop.trf.xlu0
        %v1396 = vpop.trf.xlu0
        %v1397 = vpop.trf.xlu0
        %v1398 = vpop.trf.xlu0
        %v1399 = vpop.trf.xlu0
        %v1400 = vpop.trf.xlu0
        %v1401 = vpop.trf.xlu0
        %v1402 = vpop.trf.xlu0
        %v1403 = vpop.trf.xlu0
        %v1404 = vpop.trf.xlu0
        %v1405 = vpop.trf.xlu0
        %1406 = vxpose.xlu0.b32.start [1/16] %v1242, 128
        %1407 = vxpose.xlu0.b32.cont [2/16] %v1243, 128
        %1408 = vxpose.xlu0.b32.cont [3/16] 0.0, 128
        %1409 = vxpose.xlu0.b32.cont [4/16] 0.0, 128
        %1410 = vxpose.xlu0.b32.cont [5/16] 0.0, 128
        %1411 = vxpose.xlu0.b32.cont [6/16] 0.0, 128
        %1412 = vxpose.xlu0.b32.cont [7/16] 0.0, 128
        %1413 = vxpose.xlu0.b32.cont [8/16] 0.0, 128
        %1414 = vxpose.xlu0.b32.cont [9/16] 0.0, 128
        %1415 = vxpose.xlu0.b32.cont [10/16] 0.0, 128
        %1416 = vxpose.xlu0.b32.cont [11/16] 0.0, 128
        %1417 = vxpose.xlu0.b32.cont [12/16] 0.0, 128
        %1418 = vxpose.xlu0.b32.cont [13/16] 0.0, 128
        %1419 = vxpose.xlu0.b32.cont [14/16] 0.0, 128
        %1420 = vxpose.xlu0.b32.cont [15/16] 0.0, 128
        %1421 = vxpose.xlu0.b32.end [16/16] 0.0, 128
        %v1422 = vpop.trf.xlu0
        %v1423 = vpop.trf.xlu0
        %v1424 = vpop.trf.xlu0
        %v1425 = vpop.trf.xlu0
        %v1426 = vpop.trf.xlu0
        %v1427 = vpop.trf.xlu0
        %v1428 = vpop.trf.xlu0
        %v1429 = vpop.trf.xlu0
        %v1430 = vpop.trf.xlu0
        %v1431 = vpop.trf.xlu0
        %v1432 = vpop.trf.xlu0
        %v1433 = vpop.trf.xlu0
        %v1434 = vpop.trf.xlu0
        %v1435 = vpop.trf.xlu0
        %v1436 = vpop.trf.xlu0
        %v1437 = vpop.trf.xlu0
        %1438 = vxpose.xlu0.b32.start [1/16] %v1204, 128
        %1439 = vxpose.xlu0.b32.cont [2/16] %v1205, 128
        %1440 = vxpose.xlu0.b32.cont [3/16] 0.0, 128
        %1441 = vxpose.xlu0.b32.cont [4/16] 0.0, 128
        %1442 = vxpose.xlu0.b32.cont [5/16] 0.0, 128
        %1443 = vxpose.xlu0.b32.cont [6/16] 0.0, 128
        %1444 = vxpose.xlu0.b32.cont [7/16] 0.0, 128
        %1445 = vxpose.xlu0.b32.cont [8/16] 0.0, 128
        %1446 = vxpose.xlu0.b32.cont [9/16] 0.0, 128
        %1447 = vxpose.xlu0.b32.cont [10/16] 0.0, 128
        %1448 = vxpose.xlu0.b32.cont [11/16] 0.0, 128
        %1449 = vxpose.xlu0.b32.cont [12/16] 0.0, 128
        %1450 = vxpose.xlu0.b32.cont [13/16] 0.0, 128
        %1451 = vxpose.xlu0.b32.cont [14/16] 0.0, 128
        %1452 = vxpose.xlu0.b32.cont [15/16] 0.0, 128
        %1453 = vxpose.xlu0.b32.end [16/16] 0.0, 128
        %v1454 = vpop.trf.xlu0
        %v1455 = vpop.trf.xlu0
        %v1456 = vpop.trf.xlu0
        %v1457 = vpop.trf.xlu0
        %v1458 = vpop.trf.xlu0
        %v1459 = vpop.trf.xlu0
        %v1460 = vpop.trf.xlu0
        %v1461 = vpop.trf.xlu0
        %v1462 = vpop.trf.xlu0
        %v1463 = vpop.trf.xlu0
        %v1464 = vpop.trf.xlu0
        %v1465 = vpop.trf.xlu0
        %v1466 = vpop.trf.xlu0
        %v1467 = vpop.trf.xlu0
        %v1468 = vpop.trf.xlu0
        %v1469 = vpop.trf.xlu0
        %1470 = vxpose.xlu0.b32.start [1/16] %v1244, 128
        %1471 = vxpose.xlu0.b32.cont [2/16] %v1245, 128
        %1472 = vxpose.xlu0.b32.cont [3/16] 0.0, 128
        %1473 = vxpose.xlu0.b32.cont [4/16] 0.0, 128
        %1474 = vxpose.xlu0.b32.cont [5/16] 0.0, 128
        %1475 = vxpose.xlu0.b32.cont [6/16] 0.0, 128
        %1476 = vxpose.xlu0.b32.cont [7/16] 0.0, 128
        %1477 = vxpose.xlu0.b32.cont [8/16] 0.0, 128
        %1478 = vxpose.xlu0.b32.cont [9/16] 0.0, 128
        %1479 = vxpose.xlu0.b32.cont [10/16] 0.0, 128
        %1480 = vxpose.xlu0.b32.cont [11/16] 0.0, 128
        %1481 = vxpose.xlu0.b32.cont [12/16] 0.0, 128
        %1482 = vxpose.xlu0.b32.cont [13/16] 0.0, 128
        %1483 = vxpose.xlu0.b32.cont [14/16] 0.0, 128
        %1484 = vxpose.xlu0.b32.cont [15/16] 0.0, 128
        %1485 = vxpose.xlu0.b32.end [16/16] 0.0, 128
        %v1486 = vpop.trf.xlu0
        %v1487 = vpop.trf.xlu0
        %v1488 = vpop.trf.xlu0
        %v1489 = vpop.trf.xlu0
        %v1490 = vpop.trf.xlu0
        %v1491 = vpop.trf.xlu0
        %v1492 = vpop.trf.xlu0
        %v1493 = vpop.trf.xlu0
        %v1494 = vpop.trf.xlu0
        %v1495 = vpop.trf.xlu0
        %v1496 = vpop.trf.xlu0
        %v1497 = vpop.trf.xlu0
        %v1498 = vpop.trf.xlu0
        %v1499 = vpop.trf.xlu0
        %v1500 = vpop.trf.xlu0
        %v1501 = vpop.trf.xlu0
        %v1503 = vsel %vm258, %v1262, 0
        %v1506 = vsel %vm258, %v1263, 0
        %v1509 = vsel %vm258, %v1294, 0
        %v1512 = vsel %vm258, %v1295, 0
        %v1515 = vsel %vm258, %v1326, 0
        %v1518 = vsel %vm258, %v1327, 0
        %v1521 = vsel %vm258, %v1358, 0
        %v1524 = vsel %vm258, %v1359, 0
        %v1527 = vsel %vm258, %v1390, 0
        %v1530 = vsel %vm258, %v1391, 0
        %v1533 = vsel %vm258, %v1422, 0
        %v1536 = vsel %vm258, %v1423, 0
        %v1539 = vsel %vm258, %v1454, 0
        %v1542 = vsel %vm258, %v1455, 0
        %v1545 = vsel %vm258, %v1486, 0
        %v1548 = vsel %vm258, %v1487, 0
        %1550 = vmatprep.subr.mxu0 0.0
        %1551 = vmatpush1.msra.mxu0 %v248
        %1552 = vmatprep.subr.mxu0 0.0
        %1553 = vmatpush1.msra.mxu0 %v249
        %1554 = vmatprep.subr.mxu0 0.0
        %1555 = vmatpush1.msra.mxu0 0.0
        %1556 = vmatprep.subr.mxu0 0.0
        %1557 = vmatpush1.msra.mxu0 0.0
        %1558 = vmatprep.subr.mxu0 0.0
        %1559 = vmatpush1.msra.mxu0 0.0
        %1560 = vmatprep.subr.mxu0 0.0
        %1561 = vmatpush1.msra.mxu0 0.0
        %1562 = vmatprep.subr.mxu0 0.0
        %1563 = vmatpush1.msra.mxu0 0.0
        %1564 = vmatprep.subr.mxu0 0.0
        %1565 = vmatpush1.msra.mxu0 0.0
        %1566 = vmatprep.subr.mxu0 0.0
        %1567 = vmatpush1.msra.mxu0 0.0
        %1568 = vmatprep.subr.mxu0 0.0
        %1569 = vmatpush1.msra.mxu0 0.0
        %1570 = vmatprep.subr.mxu0 0.0
        %1571 = vmatpush1.msra.mxu0 0.0
        %1572 = vmatprep.subr.mxu0 0.0
        %1573 = vmatpush1.msra.mxu0 0.0
        %1574 = vmatprep.subr.mxu0 0.0
        %1575 = vmatpush1.msra.mxu0 0.0
        %1576 = vmatprep.subr.mxu0 0.0
        %1577 = vmatpush1.msra.mxu0 0.0
        %1578 = vmatprep.subr.mxu0 0.0
        %1579 = vmatpush1.msra.mxu0 0.0
        %1580 = vmatprep.subr.mxu0 0.0
        %1581 = vmatpush1.msra.mxu0 0.0
        %1582 = vmatprep.subr.mxu0 0.0
        %1583 = vmatpush1.msra.mxu0 0.0
        %1584 = vmatprep.subr.mxu0 0.0
        %1585 = vmatpush1.msra.mxu0 0.0
        %1586 = vmatprep.subr.mxu0 0.0
        %1587 = vmatpush1.msra.mxu0 0.0
        %1588 = vmatprep.subr.mxu0 0.0
        %1589 = vmatpush1.msra.mxu0 0.0
        %1590 = vmatprep.subr.mxu0 0.0
        %1591 = vmatpush1.msra.mxu0 0.0
        %1592 = vmatprep.subr.mxu0 0.0
        %1593 = vmatpush1.msra.mxu0 0.0
        %1594 = vmatprep.subr.mxu0 0.0
        %1595 = vmatpush1.msra.mxu0 0.0
        %1596 = vmatprep.subr.mxu0 0.0
        %1597 = vmatpush1.msra.mxu0 0.0
        %1598 = vmatprep.subr.mxu0 0.0
        %1599 = vmatpush1.msra.mxu0 0.0
        %1600 = vmatprep.subr.mxu0 0.0
        %1601 = vmatpush1.msra.mxu0 0.0
        %1602 = vmatprep.subr.mxu0 0.0
        %1603 = vmatpush1.msra.mxu0 0.0
        %1604 = vmatprep.subr.mxu0 0.0
        %1605 = vmatpush1.msra.mxu0 0.0
        %1606 = vmatprep.subr.mxu0 0.0
        %1607 = vmatpush1.msra.mxu0 0.0
        %1608 = vmatprep.subr.mxu0 0.0
        %1609 = vmatpush1.msra.mxu0 0.0
        %1610 = vmatprep.subr.mxu0 0.0
        %1611 = vmatpush1.msra.mxu0 0.0
        %1612 = vmatprep.subr.mxu0 0.0
        %1613 = vmatpush1.msra.mxu0 0.0
        %1614 = vmatprep.mubr.f32.mxu0 0.0
        %1615 = vmatmul.mubr.f32.gmra.mrb[0].mxu0 %v1503
        %v1616 = vpop.f32.mrb[0].mxu0
        %v1617 = vadd.f32 0.0, %v1616
        %v1618 = vpop.f32.mrb[0].mxu0
        %1619 = vmatprep.mubr.f32.mxu0 0.0
        %1620 = vmatmul.mubr.f32.gmra.mrb[0].mxu0 %v1506
        %v1621 = vpop.f32.mrb[0].mxu0
        %v1622 = vadd.f32 0.0, %v1621
        %v1623 = vpop.f32.mrb[0].mxu0
        %1624 = vmatprep.mubr.f32.mxu0 0.0
        %1625 = vmatmul.mubr.f32.gmra.mrb[0].mxu0 %v1509
        %v1626 = vpop.f32.mrb[0].mxu0
        %v1627 = vadd.f32 0.0, %v1626
        %v1628 = vpop.f32.mrb[0].mxu0
        %1629 = vmatprep.mubr.f32.mxu0 0.0
        %1630 = vmatmul.mubr.f32.gmra.mrb[0].mxu0 %v1512
        %v1631 = vpop.f32.mrb[0].mxu0
        %v1632 = vadd.f32 0.0, %v1631
        %v1633 = vpop.f32.mrb[0].mxu0
        %1634 = vmatprep.mubr.f32.mxu0 0.0
        %1635 = vmatmul.mubr.f32.gmra.mrb[0].mxu0 %v1515
        %v1636 = vpop.f32.mrb[0].mxu0
        %v1637 = vadd.f32 0.0, %v1636
        %v1638 = vpop.f32.mrb[0].mxu0
        %1639 = vmatprep.mubr.f32.mxu0 0.0
        %1640 = vmatmul.mubr.f32.gmra.mrb[0].mxu0 %v1518
        %v1641 = vpop.f32.mrb[0].mxu0
        %v1642 = vadd.f32 0.0, %v1641
        %v1643 = vpop.f32.mrb[0].mxu0
        %1644 = vmatprep.mubr.f32.mxu0 0.0
        %1645 = vmatmul.mubr.f32.gmra.mrb[0].mxu0 %v1521
        %v1646 = vpop.f32.mrb[0].mxu0
        %v1647 = vadd.f32 0.0, %v1646
        %v1648 = vpop.f32.mrb[0].mxu0
        %1649 = vmatprep.mubr.f32.mxu0 0.0
        %1650 = vmatmul.mubr.f32.gmra.mrb[0].mxu0 %v1524
        %v1651 = vpop.f32.mrb[0].mxu0
        %v1652 = vadd.f32 0.0, %v1651
        %v1653 = vpop.f32.mrb[0].mxu0
        %1654 = vmatprep.mubr.f32.mxu0 0.0
        %1655 = vmatmul.mubr.f32.gmra.mrb[0].mxu0 %v1527
        %v1656 = vpop.f32.mrb[0].mxu0
        %v1657 = vadd.f32 0.0, %v1656
        %v1658 = vpop.f32.mrb[0].mxu0
        %1659 = vmatprep.mubr.f32.mxu0 0.0
        %1660 = vmatmul.mubr.f32.gmra.mrb[0].mxu0 %v1530
        %v1661 = vpop.f32.mrb[0].mxu0
        %v1662 = vadd.f32 0.0, %v1661
        %v1663 = vpop.f32.mrb[0].mxu0
        %1664 = vmatprep.mubr.f32.mxu0 0.0
        %1665 = vmatmul.mubr.f32.gmra.mrb[0].mxu0 %v1533
        %v1666 = vpop.f32.mrb[0].mxu0
        %v1667 = vadd.f32 0.0, %v1666
        %v1668 = vpop.f32.mrb[0].mxu0
        %1669 = vmatprep.mubr.f32.mxu0 0.0
        %1670 = vmatmul.mubr.f32.gmra.mrb[0].mxu0 %v1536
        %v1671 = vpop.f32.mrb[0].mxu0
        %v1672 = vadd.f32 0.0, %v1671
        %v1673 = vpop.f32.mrb[0].mxu0
        %1674 = vmatprep.mubr.f32.mxu0 0.0
        %1675 = vmatmul.mubr.f32.gmra.mrb[0].mxu0 %v1539
        %v1676 = vpop.f32.mrb[0].mxu0
        %v1677 = vadd.f32 0.0, %v1676
        %v1678 = vpop.f32.mrb[0].mxu0
        %1679 = vmatprep.mubr.f32.mxu0 0.0
        %1680 = vmatmul.mubr.f32.gmra.mrb[0].mxu0 %v1542
        %v1681 = vpop.f32.mrb[0].mxu0
        %v1682 = vadd.f32 0.0, %v1681
        %v1683 = vpop.f32.mrb[0].mxu0
        %1684 = vmatprep.mubr.f32.mxu0 0.0
        %1685 = vmatmul.mubr.f32.gmra.mrb[0].mxu0 %v1545
        %v1686 = vpop.f32.mrb[0].mxu0
        %v1687 = vadd.f32 0.0, %v1686
        %v1688 = vpop.f32.mrb[0].mxu0
        %1689 = vmatprep.mubr.f32.mxu0 0.0
        %1690 = vmatmul.mubr.f32.gmra.mrb[0].mxu0 %v1548
        %v1691 = vpop.f32.mrb[0].mxu0
        %v1692 = vadd.f32 0.0, %v1691
        %v1693 = vpop.f32.mrb[0].mxu0
        %1694 = vdwg.mxu0
        %1703 = vrot.lane.b32.xlu0 %v1627, 112
        %v1704 = vpop.permute.xlu0 %1703
        %1705 = vrot.lane.b32.xlu0 %v1632, 112
        %v1706 = vpop.permute.xlu0 %1705
        %1707 = vrot.lane.b32.xlu0 %v1647, 112
        %v1708 = vpop.permute.xlu0 %1707
        %1709 = vrot.lane.b32.xlu0 %v1652, 112
        %v1710 = vpop.permute.xlu0 %1709
        %1711 = vrot.lane.b32.xlu0 %v1667, 112
        %v1712 = vpop.permute.xlu0 %1711
        %1713 = vrot.lane.b32.xlu0 %v1672, 112
        %v1714 = vpop.permute.xlu0 %1713
        %1715 = vrot.lane.b32.xlu0 %v1687, 112
        %v1716 = vpop.permute.xlu0 %1715
        %1717 = vrot.lane.b32.xlu0 %v1692, 112
        %v1718 = vpop.permute.xlu0 %1717
        %v1727 = vadd.f32 %v1617, %v1704
        %v1728 = vadd.f32 %v1622, %v1706
        %v1729 = vadd.f32 %v1637, %v1708
        %v1730 = vadd.f32 %v1642, %v1710
        %v1731 = vadd.f32 %v1657, %v1712
        %v1732 = vadd.f32 %v1662, %v1714
        %v1733 = vadd.f32 %v1677, %v1716
        %v1734 = vadd.f32 %v1682, %v1718
        %1743 = vrot.lane.b32.xlu0 %v1617, 112
        %v1744 = vpop.permute.xlu0 %1743
        %1745 = vrot.lane.b32.xlu0 %v1622, 112
        %v1746 = vpop.permute.xlu0 %1745
        %1747 = vrot.lane.b32.xlu0 %v1637, 112
        %v1748 = vpop.permute.xlu0 %1747
        %1749 = vrot.lane.b32.xlu0 %v1642, 112
        %v1750 = vpop.permute.xlu0 %1749
        %1751 = vrot.lane.b32.xlu0 %v1657, 112
        %v1752 = vpop.permute.xlu0 %1751
        %1753 = vrot.lane.b32.xlu0 %v1662, 112
        %v1754 = vpop.permute.xlu0 %1753
        %1755 = vrot.lane.b32.xlu0 %v1677, 112
        %v1756 = vpop.permute.xlu0 %1755
        %1757 = vrot.lane.b32.xlu0 %v1682, 112
        %v1758 = vpop.permute.xlu0 %1757
        %v1767 = vsub.f32 %v1627, %v1744
        %v1768 = vsub.f32 %v1632, %v1746
        %v1769 = vsub.f32 %v1647, %v1748
        %v1770 = vsub.f32 %v1652, %v1750
        %v1771 = vsub.f32 %v1667, %v1752
        %v1772 = vsub.f32 %v1672, %v1754
        %v1773 = vsub.f32 %v1687, %v1756
        %v1774 = vsub.f32 %v1692, %v1758
        %v1775 = vcombine.low %v1727, %v1731
        %v1776 = vcombine.high %v1727, %v1731
        %v1778 = vunpack.c.l.s4 1983009808
        %v1779 = vunpack.c.0.s8 %v1778
        %v1780 = vlaneseq
        %v1781 = vshrl.u32 %v1780, 7
        %v1782 = vsub.s32 %v1779, %v1781
        %v1783 = vrot.slane %v1775, %v1782
        %v1785 = vunpack.c.l.s4 1983009808
        %v1786 = vunpack.c.0.s8 %v1785
        %v1787 = vlaneseq
        %v1788 = vshrl.u32 %v1787, 7
        %v1789 = vsub.s32 %v1786, %v1788
        %v1790 = vrot.slane %v1776, %v1789
        %v1791 = vcombine.low %v1729, %v1733
        %v1792 = vcombine.high %v1729, %v1733
        %v1794 = vunpack.c.l.s4 1983009808
        %v1795 = vunpack.c.0.s8 %v1794
        %v1796 = vlaneseq
        %v1797 = vshrl.u32 %v1796, 7
        %v1798 = vsub.s32 %v1795, %v1797
        %v1799 = vrot.slane %v1791, %v1798
        %v1801 = vunpack.c.l.s4 1983009808
        %v1802 = vunpack.c.0.s8 %v1801
        %v1803 = vlaneseq
        %v1804 = vshrl.u32 %v1803, 7
        %v1805 = vsub.s32 %v1802, %v1804
        %v1806 = vrot.slane %v1792, %v1805
        %v1807 = vcombine.low %v1783, %v1799
        %v1808 = vcombine.high %v1783, %v1799
        %v1810 = vunpack.c.l.s4 1934713408
        %v1811 = vunpack.c.0.s8 %v1810
        %v1812 = vlaneseq
        %v1813 = vshrl.u32 %v1812, 7
        %v1814 = vsub.s32 %v1811, %v1813
        %v1815 = vrot.slane %v1807, %v1814
        %v1817 = vunpack.c.l.s4 1934713408
        %v1818 = vunpack.c.0.s8 %v1817
        %v1819 = vlaneseq
        %v1820 = vshrl.u32 %v1819, 7
        %v1821 = vsub.s32 %v1818, %v1820
        %v1822 = vrot.slane %v1808, %v1821
        %v1823 = vcombine.low %v1790, %v1806
        %v1824 = vcombine.high %v1790, %v1806
        %v1826 = vunpack.c.l.s4 1934713408
        %v1827 = vunpack.c.0.s8 %v1826
        %v1828 = vlaneseq
        %v1829 = vshrl.u32 %v1828, 7
        %v1830 = vsub.s32 %v1827, %v1829
        %v1831 = vrot.slane %v1823, %v1830
        %v1833 = vunpack.c.l.s4 1934713408
        %v1834 = vunpack.c.0.s8 %v1833
        %v1835 = vlaneseq
        %v1836 = vshrl.u32 %v1835, 7
        %v1837 = vsub.s32 %v1834, %v1836
        %v1838 = vrot.slane %v1824, %v1837
        %v1839 = vcombine.high %v1815, 0.0
        %v1840 = vcombine.high %v1822, 0.0
        %v1841 = vcombine.high %v1831, 0.0
        %v1842 = vcombine.high %v1838, 0.0
        %v1843 = vcombine.low %v1728, %v1732
        %v1844 = vcombine.high %v1728, %v1732
        %v1846 = vunpack.c.l.s4 1983009808
        %v1847 = vunpack.c.0.s8 %v1846
        %v1848 = vlaneseq
        %v1849 = vshrl.u32 %v1848, 7
        %v1850 = vsub.s32 %v1847, %v1849
        %v1851 = vrot.slane %v1843, %v1850
        %v1853 = vunpack.c.l.s4 1983009808
        %v1854 = vunpack.c.0.s8 %v1853
        %v1855 = vlaneseq
        %v1856 = vshrl.u32 %v1855, 7
        %v1857 = vsub.s32 %v1854, %v1856
        %v1858 = vrot.slane %v1844, %v1857
        %v1859 = vcombine.low %v1730, %v1734
        %v1860 = vcombine.high %v1730, %v1734
        %v1862 = vunpack.c.l.s4 1983009808
        %v1863 = vunpack.c.0.s8 %v1862
        %v1864 = vlaneseq
        %v1865 = vshrl.u32 %v1864, 7
        %v1866 = vsub.s32 %v1863, %v1865
        %v1867 = vrot.slane %v1859, %v1866
        %v1869 = vunpack.c.l.s4 1983009808
        %v1870 = vunpack.c.0.s8 %v1869
        %v1871 = vlaneseq
        %v1872 = vshrl.u32 %v1871, 7
        %v1873 = vsub.s32 %v1870, %v1872
        %v1874 = vrot.slane %v1860, %v1873
        %v1875 = vcombine.low %v1851, %v1867
        %v1876 = vcombine.high %v1851, %v1867
        %v1878 = vunpack.c.l.s4 1934713408
        %v1879 = vunpack.c.0.s8 %v1878
        %v1880 = vlaneseq
        %v1881 = vshrl.u32 %v1880, 7
        %v1882 = vsub.s32 %v1879, %v1881
        %v1883 = vrot.slane %v1875, %v1882
        %v1885 = vunpack.c.l.s4 1934713408
        %v1886 = vunpack.c.0.s8 %v1885
        %v1887 = vlaneseq
        %v1888 = vshrl.u32 %v1887, 7
        %v1889 = vsub.s32 %v1886, %v1888
        %v1890 = vrot.slane %v1876, %v1889
        %v1891 = vcombine.low %v1858, %v1874
        %v1892 = vcombine.high %v1858, %v1874
        %v1894 = vunpack.c.l.s4 1934713408
        %v1895 = vunpack.c.0.s8 %v1894
        %v1896 = vlaneseq
        %v1897 = vshrl.u32 %v1896, 7
        %v1898 = vsub.s32 %v1895, %v1897
        %v1899 = vrot.slane %v1891, %v1898
        %v1901 = vunpack.c.l.s4 1934713408
        %v1902 = vunpack.c.0.s8 %v1901
        %v1903 = vlaneseq
        %v1904 = vshrl.u32 %v1903, 7
        %v1905 = vsub.s32 %v1902, %v1904
        %v1906 = vrot.slane %v1892, %v1905
        %v1907 = vcombine.high %v1883, 0.0
        %v1908 = vcombine.high %v1890, 0.0
        %v1909 = vcombine.high %v1899, 0.0
        %v1910 = vcombine.high %v1906, 0.0
        %1912 = vrot.lane.b32.xlu0 %v1839, 16
        %v1913 = vpop.permute.xlu0 %1912
        %1916 = vrot.lane.b32.xlu0 %v1822, 32
        %v1917 = vpop.permute.xlu0 %1916
        %1920 = vrot.lane.b32.xlu0 %v1840, 48
        %v1921 = vpop.permute.xlu0 %1920
        %1924 = vrot.lane.b32.xlu0 %v1831, 64
        %v1925 = vpop.permute.xlu0 %1924
        %1928 = vrot.lane.b32.xlu0 %v1841, 80
        %v1929 = vpop.permute.xlu0 %1928
        %1932 = vrot.lane.b32.xlu0 %v1838, 96
        %v1933 = vpop.permute.xlu0 %1932
        %1936 = vrot.lane.b32.xlu0 %v1842, 112
        %v1937 = vpop.permute.xlu0 %1936
        %1940 = vrot.lane.b32.xlu0 %v1907, 16
        %v1941 = vpop.permute.xlu0 %1940
        %1944 = vrot.lane.b32.xlu0 %v1890, 32
        %v1945 = vpop.permute.xlu0 %1944
        %1948 = vrot.lane.b32.xlu0 %v1908, 48
        %v1949 = vpop.permute.xlu0 %1948
        %1952 = vrot.lane.b32.xlu0 %v1899, 64
        %v1953 = vpop.permute.xlu0 %1952
        %1956 = vrot.lane.b32.xlu0 %v1909, 80
        %v1957 = vpop.permute.xlu0 %1956
        %1960 = vrot.lane.b32.xlu0 %v1906, 96
        %v1961 = vpop.permute.xlu0 %1960
        %1964 = vrot.lane.b32.xlu0 %v1910, 112
        %v1965 = vpop.permute.xlu0 %1964
        %v1967 = vsel %vm258, %v1815, %v1913
        %vm1968 = vcmask 261120
        %v1969 = vsel %vm1968, %v1967, %v1917
        %vm1970 = vcmask 392192
        %v1971 = vsel %vm1970, %v1969, %v1921
        %vm1972 = vcmask 523264
        %v1973 = vsel %vm1972, %v1971, %v1925
        %vm1974 = vcmask 654336
        %v1975 = vsel %vm1974, %v1973, %v1929
        %vm1976 = vcmask 785408
        %v1977 = vsel %vm1976, %v1975, %v1933
        %vm1978 = vcmask 916480
        %v1979 = vsel %vm1978, %v1977, %v1937
        %v1980 = vsel %vm258, %v1883, %v1941
        %v1981 = vsel %vm1968, %v1980, %v1945
        %v1982 = vsel %vm1970, %v1981, %v1949
        %v1983 = vsel %vm1972, %v1982, %v1953
        %v1984 = vsel %vm1974, %v1983, %v1957
        %v1985 = vsel %vm1976, %v1984, %v1961
        %v1986 = vsel %vm1978, %v1985, %v1965
        %v1989 = vcombine.low %v1979, %v1986
        %1991 = vst [vmem:[%s245] sm:$0xff] %v1989
        %v1992 = vcombine.low %v1767, %v1771
        %v1993 = vcombine.high %v1767, %v1771
        %v1995 = vunpack.c.l.s4 1983009808
        %v1996 = vunpack.c.0.s8 %v1995
        %v1997 = vlaneseq
        %v1998 = vshrl.u32 %v1997, 7
        %v1999 = vsub.s32 %v1996, %v1998
        %v2000 = vrot.slane %v1992, %v1999
        %v2002 = vunpack.c.l.s4 1983009808
        %v2003 = vunpack.c.0.s8 %v2002
        %v2004 = vlaneseq
        %v2005 = vshrl.u32 %v2004, 7
        %v2006 = vsub.s32 %v2003, %v2005
        %v2007 = vrot.slane %v1993, %v2006
        %v2008 = vcombine.low %v1769, %v1773
        %v2009 = vcombine.high %v1769, %v1773
        %v2011 = vunpack.c.l.s4 1983009808
        %v2012 = vunpack.c.0.s8 %v2011
        %v2013 = vlaneseq
        %v2014 = vshrl.u32 %v2013, 7
        %v2015 = vsub.s32 %v2012, %v2014
        %v2016 = vrot.slane %v2008, %v2015
        %v2018 = vunpack.c.l.s4 1983009808
        %v2019 = vunpack.c.0.s8 %v2018
        %v2020 = vlaneseq
        %v2021 = vshrl.u32 %v2020, 7
        %v2022 = vsub.s32 %v2019, %v2021
        %v2023 = vrot.slane %v2009, %v2022
        %v2024 = vcombine.low %v2000, %v2016
        %v2025 = vcombine.high %v2000, %v2016
        %v2027 = vunpack.c.l.s4 1934713408
        %v2028 = vunpack.c.0.s8 %v2027
        %v2029 = vlaneseq
        %v2030 = vshrl.u32 %v2029, 7
        %v2031 = vsub.s32 %v2028, %v2030
        %v2032 = vrot.slane %v2024, %v2031
        %v2034 = vunpack.c.l.s4 1934713408
        %v2035 = vunpack.c.0.s8 %v2034
        %v2036 = vlaneseq
        %v2037 = vshrl.u32 %v2036, 7
        %v2038 = vsub.s32 %v2035, %v2037
        %v2039 = vrot.slane %v2025, %v2038
        %v2040 = vcombine.low %v2007, %v2023
        %v2041 = vcombine.high %v2007, %v2023
        %v2043 = vunpack.c.l.s4 1934713408
        %v2044 = vunpack.c.0.s8 %v2043
        %v2045 = vlaneseq
        %v2046 = vshrl.u32 %v2045, 7
        %v2047 = vsub.s32 %v2044, %v2046
        %v2048 = vrot.slane %v2040, %v2047
        %v2050 = vunpack.c.l.s4 1934713408
        %v2051 = vunpack.c.0.s8 %v2050
        %v2052 = vlaneseq
        %v2053 = vshrl.u32 %v2052, 7
        %v2054 = vsub.s32 %v2051, %v2053
        %v2055 = vrot.slane %v2041, %v2054
        %v2056 = vcombine.high %v2032, 0.0
        %v2057 = vcombine.high %v2039, 0.0
        %v2058 = vcombine.high %v2048, 0.0
        %v2059 = vcombine.high %v2055, 0.0
        %v2060 = vcombine.low %v1768, %v1772
        %v2061 = vcombine.high %v1768, %v1772
        %v2063 = vunpack.c.l.s4 1983009808
        %v2064 = vunpack.c.0.s8 %v2063
        %v2065 = vlaneseq
        %v2066 = vshrl.u32 %v2065, 7
        %v2067 = vsub.s32 %v2064, %v2066
        %v2068 = vrot.slane %v2060, %v2067
        %v2070 = vunpack.c.l.s4 1983009808
        %v2071 = vunpack.c.0.s8 %v2070
        %v2072 = vlaneseq
        %v2073 = vshrl.u32 %v2072, 7
        %v2074 = vsub.s32 %v2071, %v2073
        %v2075 = vrot.slane %v2061, %v2074
        %v2076 = vcombine.low %v1770, %v1774
        %v2077 = vcombine.high %v1770, %v1774
        %v2079 = vunpack.c.l.s4 1983009808
        %v2080 = vunpack.c.0.s8 %v2079
        %v2081 = vlaneseq
        %v2082 = vshrl.u32 %v2081, 7
        %v2083 = vsub.s32 %v2080, %v2082
        %v2084 = vrot.slane %v2076, %v2083
        %v2086 = vunpack.c.l.s4 1983009808
        %v2087 = vunpack.c.0.s8 %v2086
        %v2088 = vlaneseq
        %v2089 = vshrl.u32 %v2088, 7
        %v2090 = vsub.s32 %v2087, %v2089
        %v2091 = vrot.slane %v2077, %v2090
        %v2092 = vcombine.low %v2068, %v2084
        %v2093 = vcombine.high %v2068, %v2084
        %v2095 = vunpack.c.l.s4 1934713408
        %v2096 = vunpack.c.0.s8 %v2095
        %v2097 = vlaneseq
        %v2098 = vshrl.u32 %v2097, 7
        %v2099 = vsub.s32 %v2096, %v2098
        %v2100 = vrot.slane %v2092, %v2099
        %v2102 = vunpack.c.l.s4 1934713408
        %v2103 = vunpack.c.0.s8 %v2102
        %v2104 = vlaneseq
        %v2105 = vshrl.u32 %v2104, 7
        %v2106 = vsub.s32 %v2103, %v2105
        %v2107 = vrot.slane %v2093, %v2106
        %v2108 = vcombine.low %v2075, %v2091
        %v2109 = vcombine.high %v2075, %v2091
        %v2111 = vunpack.c.l.s4 1934713408
        %v2112 = vunpack.c.0.s8 %v2111
        %v2113 = vlaneseq
        %v2114 = vshrl.u32 %v2113, 7
        %v2115 = vsub.s32 %v2112, %v2114
        %v2116 = vrot.slane %v2108, %v2115
        %v2118 = vunpack.c.l.s4 1934713408
        %v2119 = vunpack.c.0.s8 %v2118
        %v2120 = vlaneseq
        %v2121 = vshrl.u32 %v2120, 7
        %v2122 = vsub.s32 %v2119, %v2121
        %v2123 = vrot.slane %v2109, %v2122
        %v2124 = vcombine.high %v2100, 0.0
        %v2125 = vcombine.high %v2107, 0.0
        %v2126 = vcombine.high %v2116, 0.0
        %v2127 = vcombine.high %v2123, 0.0
        %2129 = vrot.lane.b32.xlu0 %v2056, 16
        %v2130 = vpop.permute.xlu0 %2129
        %2133 = vrot.lane.b32.xlu0 %v2039, 32
        %v2134 = vpop.permute.xlu0 %2133
        %2137 = vrot.lane.b32.xlu0 %v2057, 48
        %v2138 = vpop.permute.xlu0 %2137
        %2141 = vrot.lane.b32.xlu0 %v2048, 64
        %v2142 = vpop.permute.xlu0 %2141
        %2145 = vrot.lane.b32.xlu0 %v2058, 80
        %v2146 = vpop.permute.xlu0 %2145
        %2149 = vrot.lane.b32.xlu0 %v2055, 96
        %v2150 = vpop.permute.xlu0 %2149
        %2153 = vrot.lane.b32.xlu0 %v2059, 112
        %v2154 = vpop.permute.xlu0 %2153
        %2157 = vrot.lane.b32.xlu0 %v2124, 16
        %v2158 = vpop.permute.xlu0 %2157
        %2161 = vrot.lane.b32.xlu0 %v2107, 32
        %v2162 = vpop.permute.xlu0 %2161
        %2165 = vrot.lane.b32.xlu0 %v2125, 48
        %v2166 = vpop.permute.xlu0 %2165
        %2169 = vrot.lane.b32.xlu0 %v2116, 64
        %v2170 = vpop.permute.xlu0 %2169
        %2173 = vrot.lane.b32.xlu0 %v2126, 80
        %v2174 = vpop.permute.xlu0 %2173
        %2177 = vrot.lane.b32.xlu0 %v2123, 96
        %v2178 = vpop.permute.xlu0 %2177
        %2181 = vrot.lane.b32.xlu0 %v2127, 112
        %v2182 = vpop.permute.xlu0 %2181
        %v2184 = vsel %vm258, %v2032, %v2130
        %v2185 = vsel %vm1968, %v2184, %v2134
        %v2186 = vsel %vm1970, %v2185, %v2138
        %v2187 = vsel %vm1972, %v2186, %v2142
        %v2188 = vsel %vm1974, %v2187, %v2146
        %v2189 = vsel %vm1976, %v2188, %v2150
        %v2190 = vsel %vm1978, %v2189, %v2154
        %v2191 = vsel %vm258, %v2100, %v2158
        %v2192 = vsel %vm1968, %v2191, %v2162
        %v2193 = vsel %vm1970, %v2192, %v2166
        %v2194 = vsel %vm1972, %v2193, %v2170
        %v2195 = vsel %vm1974, %v2194, %v2174
        %v2196 = vsel %vm1976, %v2195, %v2178
        %v2197 = vsel %vm1978, %v2196, %v2182
        %v2200 = vcombine.low %v2190, %v2197
        %s2202 = scalar_lea.vmem %s245, 8 [#allocation8]
        %2203 = vst [vmem:[%s2202] sm:$0xff] %v2200
        %s2204 = sand.u32 %s118, 1
        %s2205 = scalar_lea.sflag [#allocation4], %s2204
        %s2206 = sand.u32 %s118, 1
        %s2207 = smul.addr %s2206, 16
        %s2208 = scalar_lea.vmem [#allocation8], %s2207
        // Predicated region
        $region45: #{tpu_custom_call.1} parent=31 // pred_check
          %p2209 = pneg %p128
        $region46: #{tpu_custom_call.1} parent=31 // pred_check_branch
          %2211 = sbr.rel (%p2209) target = $region48
        $region47: #{tpu_custom_call.1} parent=31 // pred_region
          %s2213 = ssub.s32 256, 256
          %2214 = vsyncadd %s2205, %s2213
          %s2215 = smul.addr %s25, 2
          %s2216 = smul.addr %s26, 4
          %s2217 = sadd.s32 %s2215, %s2216
          %s2218 = smul.addr %s2217, 64
          %s2219 = scalar_lea.hbm %s3, %s2218
          %s2220 = sshll.u32 %s2208, 4
          %s2221 = int_to_ptr.vmem [resolvable:$true] %s2220
          %2226 = dma.vmem_to_hbm [thread:$0]  %s2221, 256, %s2219, %s2205, 128, 128, 8
        $region48: #{tpu_custom_call.1} parent=31 // pred_fallthru
          _
      $region32: #{tpu_custom_call.1} parent=5 // pred_fallthru
        _
      %p2227 = scmp.le.s32.totalorder 2, %s16
      // Predicated region
      $region49: #{tpu_custom_call.1} parent=5 // pred_check
        %p2228 = pneg %p2227
      $region50: #{tpu_custom_call.1} parent=5 // pred_check_branch
        %2230 = sbr.rel (%p2228) target = $region52
      $region51: #{tpu_custom_call.1} parent=5 // pred_region
        %s2231 = ssub.s32 %s16, 2
        // Predicated region
        $region53: #{tpu_custom_call.1} parent=51 // pred_check
          %p2232 = pneg %p134
        $region54: #{tpu_custom_call.1} parent=51 // pred_check_branch
          %2234 = sbr.rel (%p2232) target = $region56
        $region55: #{tpu_custom_call.1} parent=51 // pred_region
          %s2235 = sand.u32 %s119, 1
          %s2236 = scalar_lea.sflag [#allocation4], %s2235
          %s2237 = sand.u32 %s119, 1
          %s2238 = smul.addr %s2237, 16
          %s2239 = scalar_lea.vmem [#allocation8], %s2238
          %2240 = dma.done %s2236, 256
        $region56: #{tpu_custom_call.1} parent=51 // pred_fallthru
          _
      $region52: #{tpu_custom_call.1} parent=5 // pred_fallthru
        _
    $region6: #{tpu_custom_call.1} parent=1 // loop_footer
      %s20 = sadd.s32 1, %s16
    $region7: #{tpu_custom_call.1} parent=1 // loop_footer_branch
      %15 = sbr.rel target = $region3
    $region8: #{tpu_custom_call.1} parent=1 // loop_exit
      _
    %2241 = vsyncpa [#allocation3], 1
    %s2242 = scalar_lea.sflag [#allocation3], 1
    %2243 = vsyncpa %s2242, 1
    %2244 = vsyncpa [#allocation6], 1
    %2245 = vsyncpa [#allocation4], 1
    %s2246 = scalar_lea.sflag [#allocation4], 1
    %2247 = vsyncpa %s2246, 1

</llo_original>
